<compile_context>
chip_gen: v6e
topology: v6e:2x2x1
jax: 0.10.0
libtpu: 0.0.40
codegen_flags: <defaults>
</compile_context>

<pallas_src>
import jax
import jax.numpy as jnp
from jax.experimental import pallas as pl
from jax.experimental.pallas import tpu as pltpu

# ----- hyper-parameters taken from Baseline.__init__ ------------------------
SAMPLE_RATE = 16000
N_FFT = 512
HOP = N_FFT // 2            # torchaudio MelSpectrogram default hop_length
N_FREQS = N_FFT // 2 + 1
F_MIN, F_MAX = 0.0, 8000.0
N_MELS = 96
N_CLASS = 50
N_CLASS_PAD = 128           # lane-dense output block; wrapper slices back to 50
BN_EPS = 1e-5
AMIN = 1e-10                # AmplitudeToDB amin (power, ref=1.0, top_db=None)
KSIZE = 3                   # Conv1d kernel size
CPAD = 3                    # Conv1d padding
POOL = 3                    # MaxPool1d kernel == stride


# ============================ host-side constants ===========================
def mel_filterbank():
    """torchaudio.functional.melscale_fbanks (HTK, norm=None): (n_freqs, n_mels)."""
    def hz_to_mel(f):
        return 2595.0 * jnp.log10(1.0 + f / 700.0)

    def mel_to_hz(m):
        return 700.0 * (10.0 ** (m / 2595.0) - 1.0)

    all_freqs = jnp.linspace(0.0, SAMPLE_RATE / 2.0, N_FREQS)
    m_pts = jnp.linspace(hz_to_mel(F_MIN), hz_to_mel(F_MAX), N_MELS + 2)
    f_pts = mel_to_hz(m_pts)
    f_diff = f_pts[1:] - f_pts[:-1]                     # (n_mels+1,)
    slopes = f_pts[None, :] - all_freqs[:, None]        # (n_freqs, n_mels+2)
    down = -slopes[:, :-2] / f_diff[:-1]
    up = slopes[:, 2:] / f_diff[1:]
    return jnp.maximum(0.0, jnp.minimum(down, up)).astype(jnp.float32)


def dft_bases_merged():
    """Merged [cos | sin] rDFT basis (n_fft, 2*n_freqs), periodic Hann folded in."""
    n = jnp.arange(N_FFT, dtype=jnp.float32)
    k = jnp.arange(N_FREQS, dtype=jnp.float32)
    win = 0.5 * (1.0 - jnp.cos(2.0 * jnp.pi * n / N_FFT))
    ang = 2.0 * jnp.pi * n[:, None] * k[None, :] / N_FFT
    dft_r = win[:, None] * jnp.cos(ang)
    dft_i = win[:, None] * jnp.sin(ang)                 # sign irrelevant: squared
    return jnp.concatenate([dft_r, dft_i], axis=1).astype(jnp.float32)


# ============================ fused Pallas kernel ===========================
def _conv_bn_relu_pool(x, w_im, shift, pool_ref):
    """Conv1d(k=3,s=1,pad=3) + folded BN + ReLU + MaxPool1d(3,3); data in (L, C)."""
    L_in, C_in = x.shape
    L_out = L_in + 2 * CPAD - (KSIZE - 1)
    z = jnp.zeros((CPAD, C_in), x.dtype)
    xp = jnp.concatenate([z, x, z], axis=0)                         # (L_in+6, C_in)
    # im2col: one (L_out, 3*C_in) x (3*C_in, C_out) bf16 MXU matmul.
    # TODO(synk): on v7x the MRB would prefer 3 accumulated K=C_in matmuls; the
    # single im2col matmul is kept (better for the MRF on v5e/v6e).
    cols = jnp.concatenate([xp[k:k + L_out, :] for k in range(KSIZE)], axis=1)
    y = jnp.dot(cols.astype(jnp.bfloat16), w_im,
                preferred_element_type=jnp.float32) + shift
    y = jnp.maximum(y, 0.0)                                         # ReLU
    # MaxPool1d(3,3), floor mode: write rows to scratch, read the 3 pool phases
    # back with strided loads (no iota, no selection matmul), elementwise max.
    L_pool = (L_out - POOL) // POOL + 1
    pool_ref[0:L_out, :] = y
    p0 = pool_ref[pl.ds(0, L_pool, stride=POOL), :]
    p1 = pool_ref[pl.ds(1, L_pool, stride=POOL), :]
    p2 = pool_ref[pl.ds(2, L_pool, stride=POOL), :]
    return jnp.maximum(jnp.maximum(p0, p1), p2)                     # (L_pool, C_out)


def fused_kernel(x2d_ref, dftc_ref, fb2_ref, bn2s_ref, bn2h_ref,
                 w0_ref, s0_ref, w1_ref, s1_ref, w2_ref, s2_ref,
                 lw_ref, lb_ref, o_ref, pool_ref):
    bt, nfp1, _ = x2d_ref.shape
    nf = nfp1 - 1
    x2d = x2d_ref[...]                                   # (Bt, n_frames+1, HOP)

    # ---- frame construction: frame f of item i = [row f | row f+1] ----------
    frames_per_item = []
    for i in range(bt):                                  # static unroll over tile
        xi = x2d[i]                                      # (nf+1, HOP)
        frames_per_item.append(
            jnp.concatenate([xi[:nf, :], xi[1:, :]], axis=1))       # (nf, N_FFT)
    frames = (frames_per_item[0] if bt == 1
              else jnp.concatenate(frames_per_item, axis=0))        # (Bt*nf, N_FFT)
    frames = frames.astype(jnp.bfloat16)

    # ---- merged re/im windowed DFT (single MXU matmul) -> power -> mel ------
    y = jnp.dot(frames, dftc_ref[...],
                preferred_element_type=jnp.float32)      # (Bt*nf, 2*N_FREQS)
    y2 = (y * y).astype(jnp.bfloat16)                    # re^2 | im^2 columns
    # power @ fb == (y*y) @ [fb; fb]  (no unaligned slicing needed)
    mel = jnp.dot(y2, fb2_ref[...],
                  preferred_element_type=jnp.float32)    # (Bt*nf, N_MELS)

    # ---- AmplitudeToDB (10x folded into scale) + BatchNorm2d(1) (eval) ------
    h = jnp.log10(jnp.maximum(mel, AMIN)) * bn2s_ref[...] + bn2h_ref[...]

    # ---- conv tail per item (bias + BN folded), avgpool -> feature ----------
    feats = []
    for i in range(bt):
        hi = h[i * nf:(i + 1) * nf, :]                              # (nf, N_MELS)
        hi = _conv_bn_relu_pool(hi, w0_ref[...], s0_ref[...], pool_ref)  # (7, 32)
        hi = _conv_bn_relu_pool(hi, w1_ref[...], s1_ref[...], pool_ref)  # (3, 32)
        hi = _conv_bn_relu_pool(hi, w2_ref[...], s2_ref[...], pool_ref)  # (2, 32)
        feats.append(jnp.mean(hi, axis=0, keepdims=True))           # (1, 32)
    feat = feats[0] if bt == 1 else jnp.concatenate(feats, axis=0)  # (Bt, 32)

    # ---- Linear (padded to 128 lanes) + Sigmoid ------------------------------
    logits = jnp.dot(feat.astype(jnp.bfloat16), lw_ref[...],
                     preferred_element_type=jnp.float32) + lb_ref[...]   # (Bt, 128)
    sig = 1.0 / (1.0 + jnp.exp(-logits))
    for i in range(bt):
        o_ref[i] = sig[i:i + 1, :]


# ============================ forward pass ==================================
def _pick_bt(batch, max_bt=8):
    """Largest batch tile (divisor of B, <= max_bt) keeping >= 2 grid steps."""
    cands = [d for d in range(1, min(batch, max_bt) + 1) if batch % d == 0]
    multi = [d for d in cands if batch // d >= 2]
    return max(multi) if multi else max(cands)


def baseline_forward(x, params):
    # x: (B, 1, T) waveform; T must be a multiple of HOP (matches Baseline usage)
    wav = x[:, 0, :]
    B, T = wav.shape
    assert T % HOP == 0, "hop-aligned framing assumes T % 256 == 0"
    n_frames = 1 + T // HOP
    bt = _pick_bt(B)
    pool_rows = ((n_frames + 4 + 7) // 8) * 8            # >= largest conv L_out

    # TODO(synk): reflect-pad + hop-aligned reshape of the raw waveform stays in
    # plain JAX (tiny metadata-level prep); everything downstream is one kernel.
    xp = jnp.pad(wav, ((0, 0), (N_FFT // 2, N_FFT // 2)), mode="reflect")
    x2d = xp.reshape(B, n_frames + 1, HOP)

    out = pl.pallas_call(
        fused_kernel,
        out_shape=jax.ShapeDtypeStruct((B, 1, N_CLASS_PAD), jnp.float32),
        grid=(B // bt,),
        in_specs=[
            pl.BlockSpec((bt, n_frames + 1, HOP), lambda i: (i, 0, 0)),
            pl.BlockSpec((N_FFT, 2 * N_FREQS), lambda i: (0, 0)),
            pl.BlockSpec((2 * N_FREQS, N_MELS), lambda i: (0, 0)),
            pl.BlockSpec((1, 1), lambda i: (0, 0)),
            pl.BlockSpec((1, 1), lambda i: (0, 0)),
            pl.BlockSpec((KSIZE * N_MELS, 32), lambda i: (0, 0)),
            pl.BlockSpec((1, 32), lambda i: (0, 0)),
            pl.BlockSpec((KSIZE * 32, 32), lambda i: (0, 0)),
            pl.BlockSpec((1, 32), lambda i: (0, 0)),
            pl.BlockSpec((KSIZE * 32, 32), lambda i: (0, 0)),
            pl.BlockSpec((1, 32), lambda i: (0, 0)),
            pl.BlockSpec((32, N_CLASS_PAD), lambda i: (0, 0)),
            pl.BlockSpec((1, N_CLASS_PAD), lambda i: (0, 0)),
        ],
        out_specs=pl.BlockSpec((bt, 1, N_CLASS_PAD), lambda i: (i, 0, 0)),
        scratch_shapes=[pltpu.VMEM((pool_rows, 32), jnp.float32)],
        compiler_params=pltpu.CompilerParams(
            dimension_semantics=("parallel",),
            vmem_limit_bytes=32 * 1024 * 1024),
    )(x2d, params["dftc"], params["fb2"],
      params["bn2_scale"], params["bn2_shift"],
      params["conv0"]["w"], params["conv0"]["shift"],
      params["conv1"]["w"], params["conv1"]["shift"],
      params["conv2"]["w"], params["conv2"]["shift"],
      params["lin_wt"], params["lin_b"])
    return out[:, 0, :N_CLASS]


# ============================ parameters ====================================
def _bn_scale_shift(gamma, beta, mean, var):
    scale = gamma / jnp.sqrt(var + BN_EPS)
    return scale, beta - mean * scale


def init_params(key):
    ks = iter(jax.random.split(key, 32))
    fb = mel_filterbank()
    p = {
        "dftc": dft_bases_merged().astype(jnp.bfloat16),                 # (512, 514)
        "fb2": jnp.concatenate([fb, fb], axis=0).astype(jnp.bfloat16),   # (514, 96)
    }

    # spec_bn = BatchNorm2d(1), eval mode; AmplitudeToDB 10x folded into scale
    g = 1.0 + 0.1 * jax.random.normal(next(ks), ())
    be = 0.1 * jax.random.normal(next(ks), ())
    mu = 0.1 * jax.random.normal(next(ks), ())
    var = 1.0 + 0.1 * jnp.abs(jax.random.normal(next(ks), ()))
    s, sh = _bn_scale_shift(g, be, mu, var)
    p["bn2_scale"] = jnp.full((1, 1), 10.0 * s, jnp.float32)
    p["bn2_shift"] = jnp.full((1, 1), sh, jnp.float32)

    # conv blocks: fold conv bias + BN(eval) into im2col weights + one shift vector
    c_ins = [N_MELS, 32, 32]
    for li, c_in in enumerate(c_ins):
        c_out = 32
        w = 0.05 * jax.random.normal(next(ks), (c_out, c_in, KSIZE), jnp.float32)
        b = 0.01 * jax.random.normal(next(ks), (c_out,), jnp.float32)
        g = 1.0 + 0.1 * jax.random.normal(next(ks), (c_out,), jnp.float32)
        be = 0.1 * jax.random.normal(next(ks), (c_out,), jnp.float32)
        mu = 0.1 * jax.random.normal(next(ks), (c_out,), jnp.float32)
        var = 1.0 + 0.1 * jnp.abs(jax.random.normal(next(ks), (c_out,), jnp.float32))
        scale, bshift = _bn_scale_shift(g, be, mu, var)
        w_folded = w * scale[:, None, None]                        # BN scale into weights
        # im2col layout: row (k * C_in + ci) of (3*C_in, C_out)
        w_im = jnp.transpose(w_folded, (2, 1, 0)).reshape(KSIZE * c_in, c_out)
        shift = (scale * b + bshift).reshape(1, c_out)             # bias + BN shift
        p[f"conv{li}"] = {"w": w_im.astype(jnp.bfloat16),
                          "shift": shift.astype(jnp.float32)}

    # Linear, padded to 128 output lanes (wrapper slices back to N_CLASS)
    lw = 0.1 * jax.random.normal(next(ks), (N_CLASS, 32), jnp.float32)
    lb = 0.01 * jax.random.normal(next(ks), (N_CLASS,), jnp.float32)
    lw_pad = jnp.zeros((32, N_CLASS_PAD), jnp.float32).at[:, :N_CLASS].set(lw.T)
    lb_pad = jnp.zeros((1, N_CLASS_PAD), jnp.float32).at[0, :N_CLASS].set(lb)
    p["lin_wt"] = lw_pad.astype(jnp.bfloat16)
    p["lin_b"] = lb_pad
    return p


# ============================ main ==========================================
if __name__ == "__main__":
    key = jax.random.PRNGKey(0)
    kx, kp = jax.random.split(key)
    B, T = 2, 4096
    x = jax.random.normal(kx, (B, 1, T), dtype=jnp.float32)
    params = init_params(kp)

    out = jax.jit(baseline_forward)(x, params)
    jax.block_until_ready(out)

    assert out.shape == (B, N_CLASS), out.shape
    assert bool(jnp.all(jnp.isfinite(out)))
    assert bool(jnp.all((out >= 0.0) & (out <= 1.0)))
    print("KERNEL_OK")
</pallas_src>

<mosaic_0001>
module attributes {stable_mosaic.version = 11 : i64} {
  func.func @fused_kernel(%arg0: i32, %arg1: memref<1x18x256xf32, #tpu.memory_space<vmem>>, %arg2: memref<512x514xbf16, #tpu.memory_space<vmem>>, %arg3: memref<514x96xbf16, #tpu.memory_space<vmem>>, %arg4: memref<1x1xf32, #tpu.memory_space<vmem>>, %arg5: memref<1x1xf32, #tpu.memory_space<vmem>>, %arg6: memref<288x32xbf16, #tpu.memory_space<vmem>>, %arg7: memref<1x32xf32, #tpu.memory_space<vmem>>, %arg8: memref<96x32xbf16, #tpu.memory_space<vmem>>, %arg9: memref<1x32xf32, #tpu.memory_space<vmem>>, %arg10: memref<96x32xbf16, #tpu.memory_space<vmem>>, %arg11: memref<1x32xf32, #tpu.memory_space<vmem>>, %arg12: memref<32x128xbf16, #tpu.memory_space<vmem>>, %arg13: memref<1x128xf32, #tpu.memory_space<vmem>>, %arg14: memref<1x1x128xf32, #tpu.memory_space<vmem>>, %arg15: memref<24x32xf32, #tpu.memory_space<vmem>>) attributes {dimension_semantics = [#tpu.dimension_semantics<parallel>], iteration_bounds = array<i64: 2>, scalar_prefetch = 0 : i64, scratch_operands = 1 : i64, tpu.core_type = #tpu.core_type<tc>, window_params = [{transform_indices = @transform_0, window_bounds = array<i64: 1, 18, 256>}, {pipeline_mode = #tpu.pipeline_mode<synchronous>, transform_indices = @transform_1, window_bounds = array<i64: 512, 514>}, {pipeline_mode = #tpu.pipeline_mode<synchronous>, transform_indices = @transform_2, window_bounds = array<i64: 514, 96>}, {pipeline_mode = #tpu.pipeline_mode<synchronous>, transform_indices = @transform_3, window_bounds = array<i64: 1, 1>}, {pipeline_mode = #tpu.pipeline_mode<synchronous>, transform_indices = @transform_4, window_bounds = array<i64: 1, 1>}, {pipeline_mode = #tpu.pipeline_mode<synchronous>, transform_indices = @transform_5, window_bounds = array<i64: 288, 32>}, {pipeline_mode = #tpu.pipeline_mode<synchronous>, transform_indices = @transform_6, window_bounds = array<i64: 1, 32>}, {pipeline_mode = #tpu.pipeline_mode<synchronous>, transform_indices = @transform_7, window_bounds = array<i64: 96, 32>}, {pipeline_mode = #tpu.pipeline_mode<synchronous>, transform_indices = @transform_8, window_bounds = array<i64: 1, 32>}, {pipeline_mode = #tpu.pipeline_mode<synchronous>, transform_indices = @transform_9, window_bounds = array<i64: 96, 32>}, {pipeline_mode = #tpu.pipeline_mode<synchronous>, transform_indices = @transform_10, window_bounds = array<i64: 1, 32>}, {pipeline_mode = #tpu.pipeline_mode<synchronous>, transform_indices = @transform_11, window_bounds = array<i64: 32, 128>}, {pipeline_mode = #tpu.pipeline_mode<synchronous>, transform_indices = @transform_12, window_bounds = array<i64: 1, 128>}, {transform_indices = @transform_13, window_bounds = array<i64: 1, 1, 128>}]} {
    %c0 = arith.constant 0 : index
    %c0_0 = arith.constant 0 : index
    %c0_1 = arith.constant 0 : index
    %0 = vector.load %arg1[%c0, %c0_0, %c0_1] : memref<1x18x256xf32, #tpu.memory_space<vmem>>, vector<1x18x256xf32>
    %1 = vector.shape_cast %0 : vector<1x18x256xf32> to vector<18x256xf32>
    %2 = vector.extract_strided_slice %1 {offsets = [0, 0], sizes = [17, 256], strides = [1, 1]} : vector<18x256xf32> to vector<17x256xf32>
    %3 = vector.extract_strided_slice %1 {offsets = [1, 0], sizes = [17, 256], strides = [1, 1]} : vector<18x256xf32> to vector<17x256xf32>
    %4 = tpu.concatenate %2, %3 in 1 : vector<17x256xf32>, vector<17x256xf32> -> vector<17x512xf32>
    %5 = arith.truncf %4 : vector<17x512xf32> to vector<17x512xbf16>
    %c0_2 = arith.constant 0 : index
    %c0_3 = arith.constant 0 : index
    %6 = vector.load %arg2[%c0_2, %c0_3] : memref<512x514xbf16, #tpu.memory_space<vmem>>, vector<512x514xbf16>
    %cst = arith.constant dense<0.000000e+00> : vector<17x514xf32>
    %7 = tpu.matmul %5, %6, %cst {dimension_numbers = #tpu.dot_dimension_numbers<[1], [0], [0], [1], [0, 0, 1, 1], [], []>} : vector<17x512xbf16>, vector<512x514xbf16>, vector<17x514xf32> -> vector<17x514xf32>
    %8 = arith.mulf %7, %7 : vector<17x514xf32>
    %9 = arith.truncf %8 : vector<17x514xf32> to vector<17x514xbf16>
    %c0_4 = arith.constant 0 : index
    %c0_5 = arith.constant 0 : index
    %10 = vector.load %arg3[%c0_4, %c0_5] : memref<514x96xbf16, #tpu.memory_space<vmem>>, vector<514x96xbf16>
    %cst_6 = arith.constant dense<0.000000e+00> : vector<17x96xf32>
    %11 = tpu.matmul %9, %10, %cst_6 {dimension_numbers = #tpu.dot_dimension_numbers<[1], [0], [0], [1], [0, 0, 1, 1], [], []>} : vector<17x514xbf16>, vector<514x96xbf16>, vector<17x96xf32> -> vector<17x96xf32>
    %cst_7 = arith.constant 1.000000e-10 : f32
    %12 = vector.broadcast %cst_7 : f32 to vector<17x96xf32>
    %13 = arith.maximumf %11, %12 : vector<17x96xf32>
    %14 = math.log %13 : vector<17x96xf32>
    %cst_8 = arith.constant 0.434294492 : f32
    %15 = vector.broadcast %cst_8 : f32 to vector<17x96xf32>
    %16 = arith.mulf %14, %15 : vector<17x96xf32>
    %c0_9 = arith.constant 0 : index
    %c0_10 = arith.constant 0 : index
    %17 = vector.load %arg4[%c0_9, %c0_10] : memref<1x1xf32, #tpu.memory_space<vmem>>, vector<1x1xf32>
    %18 = vector.broadcast %17 : vector<1x1xf32> to vector<17x96xf32>
    %19 = arith.mulf %16, %18 : vector<17x96xf32>
    %c0_11 = arith.constant 0 : index
    %c0_12 = arith.constant 0 : index
    %20 = vector.load %arg5[%c0_11, %c0_12] : memref<1x1xf32, #tpu.memory_space<vmem>>, vector<1x1xf32>
    %21 = vector.broadcast %20 : vector<1x1xf32> to vector<17x96xf32>
    %22 = arith.addf %19, %21 : vector<17x96xf32>
    %c0_13 = arith.constant 0 : index
    %c0_14 = arith.constant 0 : index
    %23 = vector.load %arg6[%c0_13, %c0_14] : memref<288x32xbf16, #tpu.memory_space<vmem>>, vector<288x32xbf16>
    %c0_15 = arith.constant 0 : index
    %c0_16 = arith.constant 0 : index
    %24 = vector.load %arg7[%c0_15, %c0_16] : memref<1x32xf32, #tpu.memory_space<vmem>>, vector<1x32xf32>
    %cst_17 = arith.constant 0.000000e+00 : f32
    %25 = vector.broadcast %cst_17 : f32 to vector<3x96xf32>
    %26 = tpu.concatenate %25, %22, %25 in 0 : vector<3x96xf32>, vector<17x96xf32>, vector<3x96xf32> -> vector<23x96xf32>
    %27 = vector.extract_strided_slice %26 {offsets = [0, 0], sizes = [21, 96], strides = [1, 1]} : vector<23x96xf32> to vector<21x96xf32>
    %28 = vector.extract_strided_slice %26 {offsets = [1, 0], sizes = [21, 96], strides = [1, 1]} : vector<23x96xf32> to vector<21x96xf32>
    %29 = vector.extract_strided_slice %26 {offsets = [2, 0], sizes = [21, 96], strides = [1, 1]} : vector<23x96xf32> to vector<21x96xf32>
    %30 = tpu.concatenate %27, %28, %29 in 1 : vector<21x96xf32>, vector<21x96xf32>, vector<21x96xf32> -> vector<21x288xf32>
    %31 = arith.truncf %30 : vector<21x288xf32> to vector<21x288xbf16>
    %cst_18 = arith.constant dense<0.000000e+00> : vector<21x32xf32>
    %32 = tpu.matmul %31, %23, %cst_18 {dimension_numbers = #tpu.dot_dimension_numbers<[1], [0], [0], [1], [0, 0, 1, 1], [], []>} : vector<21x288xbf16>, vector<288x32xbf16>, vector<21x32xf32> -> vector<21x32xf32>
    %33 = vector.broadcast %24 : vector<1x32xf32> to vector<21x32xf32>
    %34 = arith.addf %32, %33 : vector<21x32xf32>
    %cst_19 = arith.constant 0.000000e+00 : f32
    %35 = vector.broadcast %cst_19 : f32 to vector<21x32xf32>
    %36 = arith.maximumf %34, %35 : vector<21x32xf32>
    %c0_20 = arith.constant 0 : index
    %c0_21 = arith.constant 0 : index
    %37 = vector.load %arg15[%c0_20, %c0_21] : memref<24x32xf32, #tpu.memory_space<vmem>>, vector<21x32xf32>
    tpu.vector_store %arg15[%c0_20, %c0_21], %36 {strides = array<i32>} : memref<24x32xf32, #tpu.memory_space<vmem>>, vector<21x32xf32>,
    %c0_22 = arith.constant 0 : index
    %c0_23 = arith.constant 0 : index
    %38 = tpu.strided_load %arg15[%c0_22, %c0_23] {strides = array<i32: 3, 1>} : memref<24x32xf32, #tpu.memory_space<vmem>>, vector<7x32xf32>
    %c1 = arith.constant 1 : index
    %c0_24 = arith.constant 0 : index
    %39 = tpu.strided_load %arg15[%c1, %c0_24] {strides = array<i32: 3, 1>} : memref<24x32xf32, #tpu.memory_space<vmem>>, vector<7x32xf32>
    %c2 = arith.constant 2 : index
    %c0_25 = arith.constant 0 : index
    %40 = tpu.strided_load %arg15[%c2, %c0_25] {strides = array<i32: 3, 1>} : memref<24x32xf32, #tpu.memory_space<vmem>>, vector<7x32xf32>
    %41 = arith.maximumf %38, %39 : vector<7x32xf32>
    %42 = arith.maximumf %41, %40 : vector<7x32xf32>
    %c0_26 = arith.constant 0 : index
    %c0_27 = arith.constant 0 : index
    %43 = vector.load %arg8[%c0_26, %c0_27] : memref<96x32xbf16, #tpu.memory_space<vmem>>, vector<96x32xbf16>
    %c0_28 = arith.constant 0 : index
    %c0_29 = arith.constant 0 : index
    %44 = vector.load %arg9[%c0_28, %c0_29] : memref<1x32xf32, #tpu.memory_space<vmem>>, vector<1x32xf32>
    %cst_30 = arith.constant 0.000000e+00 : f32
    %45 = vector.broadcast %cst_30 : f32 to vector<3x32xf32>
    %46 = tpu.concatenate %45, %42, %45 in 0 : vector<3x32xf32>, vector<7x32xf32>, vector<3x32xf32> -> vector<13x32xf32>
    %47 = vector.extract_strided_slice %46 {offsets = [0, 0], sizes = [11, 32], strides = [1, 1]} : vector<13x32xf32> to vector<11x32xf32>
    %48 = vector.extract_strided_slice %46 {offsets = [1, 0], sizes = [11, 32], strides = [1, 1]} : vector<13x32xf32> to vector<11x32xf32>
    %49 = vector.extract_strided_slice %46 {offsets = [2, 0], sizes = [11, 32], strides = [1, 1]} : vector<13x32xf32> to vector<11x32xf32>
    %50 = tpu.concatenate %47, %48, %49 in 1 : vector<11x32xf32>, vector<11x32xf32>, vector<11x32xf32> -> vector<11x96xf32>
    %51 = arith.truncf %50 : vector<11x96xf32> to vector<11x96xbf16>
    %cst_31 = arith.constant dense<0.000000e+00> : vector<11x32xf32>
    %52 = tpu.matmul %51, %43, %cst_31 {dimension_numbers = #tpu.dot_dimension_numbers<[1], [0], [0], [1], [0, 0, 1, 1], [], []>} : vector<11x96xbf16>, vector<96x32xbf16>, vector<11x32xf32> -> vector<11x32xf32>
    %53 = vector.broadcast %44 : vector<1x32xf32> to vector<11x32xf32>
    %54 = arith.addf %52, %53 : vector<11x32xf32>
    %cst_32 = arith.constant 0.000000e+00 : f32
    %55 = vector.broadcast %cst_32 : f32 to vector<11x32xf32>
    %56 = arith.maximumf %54, %55 : vector<11x32xf32>
    %c0_33 = arith.constant 0 : index
    %c0_34 = arith.constant 0 : index
    %57 = vector.load %arg15[%c0_33, %c0_34] : memref<24x32xf32, #tpu.memory_space<vmem>>, vector<11x32xf32>
    tpu.vector_store %arg15[%c0_33, %c0_34], %56 {strides = array<i32>} : memref<24x32xf32, #tpu.memory_space<vmem>>, vector<11x32xf32>,
    %c0_35 = arith.constant 0 : index
    %c0_36 = arith.constant 0 : index
    %58 = tpu.strided_load %arg15[%c0_35, %c0_36] {strides = array<i32: 3, 1>} : memref<24x32xf32, #tpu.memory_space<vmem>>, vector<3x32xf32>
    %c1_37 = arith.constant 1 : index
    %c0_38 = arith.constant 0 : index
    %59 = tpu.strided_load %arg15[%c1_37, %c0_38] {strides = array<i32: 3, 1>} : memref<24x32xf32, #tpu.memory_space<vmem>>, vector<3x32xf32>
    %c2_39 = arith.constant 2 : index
    %c0_40 = arith.constant 0 : index
    %60 = tpu.strided_load %arg15[%c2_39, %c0_40] {strides = array<i32: 3, 1>} : memref<24x32xf32, #tpu.memory_space<vmem>>, vector<3x32xf32>
    %61 = arith.maximumf %58, %59 : vector<3x32xf32>
    %62 = arith.maximumf %61, %60 : vector<3x32xf32>
    %c0_41 = arith.constant 0 : index
    %c0_42 = arith.constant 0 : index
    %63 = vector.load %arg10[%c0_41, %c0_42] : memref<96x32xbf16, #tpu.memory_space<vmem>>, vector<96x32xbf16>
    %c0_43 = arith.constant 0 : index
    %c0_44 = arith.constant 0 : index
    %64 = vector.load %arg11[%c0_43, %c0_44] : memref<1x32xf32, #tpu.memory_space<vmem>>, vector<1x32xf32>
    %cst_45 = arith.constant 0.000000e+00 : f32
    %65 = vector.broadcast %cst_45 : f32 to vector<3x32xf32>
    %66 = tpu.concatenate %65, %62, %65 in 0 : vector<3x32xf32>, vector<3x32xf32>, vector<3x32xf32> -> vector<9x32xf32>
    %67 = vector.extract_strided_slice %66 {offsets = [0, 0], sizes = [7, 32], strides = [1, 1]} : vector<9x32xf32> to vector<7x32xf32>
    %68 = vector.extract_strided_slice %66 {offsets = [1, 0], sizes = [7, 32], strides = [1, 1]} : vector<9x32xf32> to vector<7x32xf32>
    %69 = vector.extract_strided_slice %66 {offsets = [2, 0], sizes = [7, 32], strides = [1, 1]} : vector<9x32xf32> to vector<7x32xf32>
    %70 = tpu.concatenate %67, %68, %69 in 1 : vector<7x32xf32>, vector<7x32xf32>, vector<7x32xf32> -> vector<7x96xf32>
    %71 = arith.truncf %70 : vector<7x96xf32> to vector<7x96xbf16>
    %cst_46 = arith.constant dense<0.000000e+00> : vector<7x32xf32>
    %72 = tpu.matmul %71, %63, %cst_46 {dimension_numbers = #tpu.dot_dimension_numbers<[1], [0], [0], [1], [0, 0, 1, 1], [], []>} : vector<7x96xbf16>, vector<96x32xbf16>, vector<7x32xf32> -> vector<7x32xf32>
    %73 = vector.broadcast %64 : vector<1x32xf32> to vector<7x32xf32>
    %74 = arith.addf %72, %73 : vector<7x32xf32>
    %cst_47 = arith.constant 0.000000e+00 : f32
    %75 = vector.broadcast %cst_47 : f32 to vector<7x32xf32>
    %76 = arith.maximumf %74, %75 : vector<7x32xf32>
    %c0_48 = arith.constant 0 : index
    %c0_49 = arith.constant 0 : index
    %77 = vector.load %arg15[%c0_48, %c0_49] : memref<24x32xf32, #tpu.memory_space<vmem>>, vector<7x32xf32>
    tpu.vector_store %arg15[%c0_48, %c0_49], %76 {strides = array<i32>} : memref<24x32xf32, #tpu.memory_space<vmem>>, vector<7x32xf32>,
    %c0_50 = arith.constant 0 : index
    %c0_51 = arith.constant 0 : index
    %78 = tpu.strided_load %arg15[%c0_50, %c0_51] {strides = array<i32: 3, 1>} : memref<24x32xf32, #tpu.memory_space<vmem>>, vector<2x32xf32>
    %c1_52 = arith.constant 1 : index
    %c0_53 = arith.constant 0 : index
    %79 = tpu.strided_load %arg15[%c1_52, %c0_53] {strides = array<i32: 3, 1>} : memref<24x32xf32, #tpu.memory_space<vmem>>, vector<2x32xf32>
    %c2_54 = arith.constant 2 : index
    %c0_55 = arith.constant 0 : index
    %80 = tpu.strided_load %arg15[%c2_54, %c0_55] {strides = array<i32: 3, 1>} : memref<24x32xf32, #tpu.memory_space<vmem>>, vector<2x32xf32>
    %81 = arith.maximumf %78, %79 : vector<2x32xf32>
    %82 = arith.maximumf %81, %80 : vector<2x32xf32>
    %cst_56 = arith.constant dense<0.000000e+00> : vector<32xf32>
    %83 = vector.multi_reduction <add>, %82, %cst_56 [0] : vector<2x32xf32> to vector<32xf32>
    %84 = vector.shape_cast %83 : vector<32xf32> to vector<1x32xf32>
    %cst_57 = arith.constant 2.000000e+00 : f32
    %85 = vector.broadcast %cst_57 : f32 to vector<1x32xf32>
    %86 = arith.divf %84, %85 : vector<1x32xf32>
    %87 = arith.truncf %86 : vector<1x32xf32> to vector<1x32xbf16>
    %c0_58 = arith.constant 0 : index
    %c0_59 = arith.constant 0 : index
    %88 = vector.load %arg12[%c0_58, %c0_59] : memref<32x128xbf16, #tpu.memory_space<vmem>>, vector<32x128xbf16>
    %cst_60 = arith.constant dense<0.000000e+00> : vector<1x128xf32>
    %89 = tpu.matmul %87, %88, %cst_60 {dimension_numbers = #tpu.dot_dimension_numbers<[1], [0], [0], [1], [0, 0, 1, 1], [], []>} : vector<1x32xbf16>, vector<32x128xbf16>, vector<1x128xf32> -> vector<1x128xf32>
    %c0_61 = arith.constant 0 : index
    %c0_62 = arith.constant 0 : index
    %90 = vector.load %arg13[%c0_61, %c0_62] : memref<1x128xf32, #tpu.memory_space<vmem>>, vector<1x128xf32>
    %91 = arith.addf %89, %90 : vector<1x128xf32>
    %cst_63 = arith.constant 0.000000e+00 : f32
    %92 = vector.broadcast %cst_63 : f32 to vector<1x128xf32>
    %93 = arith.subf %92, %91 : vector<1x128xf32>
    %94 = math.exp %93 : vector<1x128xf32>
    %cst_64 = arith.constant 1.000000e+00 : f32
    %95 = vector.broadcast %cst_64 : f32 to vector<1x128xf32>
    %96 = arith.addf %95, %94 : vector<1x128xf32>
    %cst_65 = arith.constant 1.000000e+00 : f32
    %97 = vector.broadcast %cst_65 : f32 to vector<1x128xf32>
    %98 = arith.divf %97, %96 : vector<1x128xf32>
    %c0_66 = arith.constant 0 : index
    %c0_67 = arith.constant 0 : index
    %c0_68 = arith.constant 0 : index
    %99 = vector.load %arg14[%c0_66, %c0_67, %c0_68] : memref<1x1x128xf32, #tpu.memory_space<vmem>>, vector<1x1x128xf32>
    %100 = vector.shape_cast %99 : vector<1x1x128xf32> to vector<1x128xf32>
    %101 = vector.shape_cast %98 : vector<1x128xf32> to vector<1x1x128xf32>
    tpu.vector_store %arg14[%c0_66, %c0_67, %c0_68], %101 {strides = array<i32>} : memref<1x1x128xf32, #tpu.memory_space<vmem>>, vector<1x1x128xf32>,
    return
  }
  func.func @transform_0(%arg0: i32) -> (i32, i32, i32) {
    %c0_i32 = arith.constant 0 : i32
    %c0_i32_0 = arith.constant 0 : i32
    %c0_i32_1 = arith.constant 0 : i32
    return %arg0, %c0_i32, %c0_i32_0 : i32, i32, i32
  }
  func.func @transform_1(%arg0: i32) -> (i32, i32) {
    %c0_i32 = arith.constant 0 : i32
    %c0_i32_0 = arith.constant 0 : i32
    %c0_i32_1 = arith.constant 0 : i32
    return %c0_i32, %c0_i32_0 : i32, i32
  }
  func.func @transform_2(%arg0: i32) -> (i32, i32) {
    %c0_i32 = arith.constant 0 : i32
    %c0_i32_0 = arith.constant 0 : i32
    %c0_i32_1 = arith.constant 0 : i32
    return %c0_i32, %c0_i32_0 : i32, i32
  }
  func.func @transform_3(%arg0: i32) -> (i32, i32) {
    %c0_i32 = arith.constant 0 : i32
    %c0_i32_0 = arith.constant 0 : i32
    %c0_i32_1 = arith.constant 0 : i32
    return %c0_i32, %c0_i32_0 : i32, i32
  }
  func.func @transform_4(%arg0: i32) -> (i32, i32) {
    %c0_i32 = arith.constant 0 : i32
    %c0_i32_0 = arith.constant 0 : i32
    %c0_i32_1 = arith.constant 0 : i32
    return %c0_i32, %c0_i32_0 : i32, i32
  }
  func.func @transform_5(%arg0: i32) -> (i32, i32) {
    %c0_i32 = arith.constant 0 : i32
    %c0_i32_0 = arith.constant 0 : i32
    %c0_i32_1 = arith.constant 0 : i32
    return %c0_i32, %c0_i32_0 : i32, i32
  }
  func.func @transform_6(%arg0: i32) -> (i32, i32) {
    %c0_i32 = arith.constant 0 : i32
    %c0_i32_0 = arith.constant 0 : i32
    %c0_i32_1 = arith.constant 0 : i32
    return %c0_i32, %c0_i32_0 : i32, i32
  }
  func.func @transform_7(%arg0: i32) -> (i32, i32) {
    %c0_i32 = arith.constant 0 : i32
    %c0_i32_0 = arith.constant 0 : i32
    %c0_i32_1 = arith.constant 0 : i32
    return %c0_i32, %c0_i32_0 : i32, i32
  }
  func.func @transform_8(%arg0: i32) -> (i32, i32) {
    %c0_i32 = arith.constant 0 : i32
    %c0_i32_0 = arith.constant 0 : i32
    %c0_i32_1 = arith.constant 0 : i32
    return %c0_i32, %c0_i32_0 : i32, i32
  }
  func.func @transform_9(%arg0: i32) -> (i32, i32) {
    %c0_i32 = arith.constant 0 : i32
    %c0_i32_0 = arith.constant 0 : i32
    %c0_i32_1 = arith.constant 0 : i32
    return %c0_i32, %c0_i32_0 : i32, i32
  }
  func.func @transform_10(%arg0: i32) -> (i32, i32) {
    %c0_i32 = arith.constant 0 : i32
    %c0_i32_0 = arith.constant 0 : i32
    %c0_i32_1 = arith.constant 0 : i32
    return %c0_i32, %c0_i32_0 : i32, i32
  }
  func.func @transform_11(%arg0: i32) -> (i32, i32) {
    %c0_i32 = arith.constant 0 : i32
    %c0_i32_0 = arith.constant 0 : i32
    %c0_i32_1 = arith.constant 0 : i32
    return %c0_i32, %c0_i32_0 : i32, i32
  }
  func.func @transform_12(%arg0: i32) -> (i32, i32) {
    %c0_i32 = arith.constant 0 : i32
    %c0_i32_0 = arith.constant 0 : i32
    %c0_i32_1 = arith.constant 0 : i32
    return %c0_i32, %c0_i32_0 : i32, i32
  }
  func.func @transform_13(%arg0: i32) -> (i32, i32, i32) {
    %c0_i32 = arith.constant 0 : i32
    %c0_i32_0 = arith.constant 0 : i32
    %c0_i32_1 = arith.constant 0 : i32
    return %arg0, %c0_i32, %c0_i32_0 : i32, i32, i32
  }
}

</mosaic_0001>

<llo_original>
// kernel: baseline_forward.1
$region0: #{baseline_forward.1}
  #allocation0 [shape = 'u32[]', space=smem, size = 0x4, offset = 0x4, fixed_abs, tag = 'smem constant byte address 0x4 - core index']
  #allocation1 [shape = 'u32[144,128]{1,0:T(1,128)}', space=vmem, size = 0x12000, scoped, tag = 'internal scratch']
  #allocation2 [shape = 'f32[24,32]{1,0:T(8,128)}', space=vmem, size = 0x3000, scoped, tag = 'scratch operand']
  #allocation3 [shape = 'f32[1,1]{1,0:T(1,128)S(1)}', space=vmem, size = 0x200, scoped, tag = 'scoped memory for baseline_forward.1']
  #allocation4 [shape = 'f32[1,1]{1,0:T(1,128)S(1)}', space=vmem, size = 0x200, scoped, tag = 'scoped memory for baseline_forward.1']
  %s0 = inlined_call_operand.vmem [shape: f32[2,18,256], index: 0, kind: input, shape index: {}]
  %s1 = inlined_call_operand.vmem [shape: bf16[512,514], index: 1, kind: input, shape index: {}]
  %s2 = inlined_call_operand.vmem [shape: bf16[514,96], index: 2, kind: input, shape index: {}]
  %s3 = inlined_call_operand.<no memory space> [shape: f32[1,1], index: 3, kind: input, shape index: {}]
  %s4 = inlined_call_operand.<no memory space> [shape: f32[1,1], index: 4, kind: input, shape index: {}]
  %s5 = inlined_call_operand.vmem [shape: bf16[288,32], index: 5, kind: input, shape index: {}]
  %s6 = inlined_call_operand.vmem [shape: f32[1,32], index: 6, kind: input, shape index: {}]
  %s7 = inlined_call_operand.vmem [shape: bf16[96,32], index: 7, kind: input, shape index: {}]
  %s8 = inlined_call_operand.vmem [shape: f32[1,32], index: 8, kind: input, shape index: {}]
  %s9 = inlined_call_operand.vmem [shape: bf16[96,32], index: 9, kind: input, shape index: {}]
  %s10 = inlined_call_operand.vmem [shape: f32[1,32], index: 10, kind: input, shape index: {}]
  %s11 = inlined_call_operand.vmem [shape: bf16[32,128], index: 11, kind: input, shape index: {}]
  %s12 = inlined_call_operand.vmem [shape: f32[1,128], index: 12, kind: input, shape index: {}]
  %s13 = inlined_call_operand.hbm [shape: f32[2,1,128], index: 13, kind: output, shape index: {}]
  %s14 = sld [smem:[#allocation0]]
  $region85: #{baseline_forward.1} parent=0
    _
  %s16 = ssub.s32 1, %s14
  %s17 = scalar_select 0, %s16, %s14
  %v18 = vstv %s3
  %19 = vst [vmem:[#allocation3] sm:$0x1] %v18
  %v20 = vstv %s4
  %21 = vst [vmem:[#allocation4] sm:$0x1] %v20
  $region1: #{baseline_forward.1} parent=0
    #allocation5 [shape = 'u8[1024]{0}', space=vmem, size = 0x400, scoped, tag = 'output window, operand 0']
    #allocation6 [shape = 's32[2]{0}', space=sflag, size = 0x8, scoped, tag = 'scoped memory for baseline_forward.1']
    %22 = vsyncpa [#allocation6], 0
    %s23 = scalar_lea.sflag [#allocation6], 1
    %24 = vsyncpa %s23, 0
    loop: start=0, step=1, limit=4
    $region2: #{baseline_forward.1} parent=1 // loop_pre_header
      _
    $region3: #{baseline_forward.1} parent=1 // loop_header
      %s26 = sphi 0, %s30
      %p27 = scmp.ge.s32.totalorder %s26, 4
      %s36 = sphi 0, %s38
      %s39 = sphi 0, %s36
      %s40 = sphi 0, %s39
      %s56 = sphi 0, %s40
      %s60 = sphi 0, %s60
      %s62 = sphi 0, %s60
      %s63 = sphi 0, %s62
      %s77 = sphi 0, %s63
      %s81 = sphi 0, %s81
      %s83 = sphi 0, %s81
      %s84 = sphi 0, %s83
      %s98 = sphi 0, %s84
      %s102 = sphi 0, %s102
      %s104 = sphi 0, %s102
      %s105 = sphi 0, %s104
      %s119 = sphi 0, %s105
      %s123 = sphi 0, %s123
      %s125 = sphi 0, %s123
      %s126 = sphi 0, %s125
      %s140 = sphi 0, %s126
      %s144 = sphi 0, %s144
      %s146 = sphi 0, %s144
      %s147 = sphi 0, %s146
      %s161 = sphi 0, %s147
      %s165 = sphi 0, %s165
      %s167 = sphi 0, %s165
      %s168 = sphi 0, %s167
      %s182 = sphi 0, %s168
      %s186 = sphi 0, %s186
      %s188 = sphi 0, %s186
      %s189 = sphi 0, %s188
      %s203 = sphi 0, %s189
      %s207 = sphi 0, %s207
      %s209 = sphi 0, %s207
      %s210 = sphi 0, %s209
      %s224 = sphi 0, %s210
      %s228 = sphi 0, %s228
      %s230 = sphi 0, %s228
      %s231 = sphi 0, %s230
      %s245 = sphi 0, %s231
      %s249 = sphi 0, %s249
      %s251 = sphi 0, %s249
      %s252 = sphi 0, %s251
      %s266 = sphi 0, %s252
      %s270 = sphi 0, %s270
      %s272 = sphi 0, %s270
      %s273 = sphi 0, %s272
      %s287 = sphi 0, %s273
      %s291 = sphi 0, %s291
      %s293 = sphi 0, %s291
      %s294 = sphi 0, %s293
      %s308 = sphi 0, %s294
      %s314 = sphi 0, %s316
      %s317 = sphi 0, %s314
      %s318 = sphi 0, %s317
      %s334 = sphi 0, %s318
    $region4: #{baseline_forward.1} parent=1 // loop_header_branch
      %29 = sbr.rel (%p27) target = $region8
    $region5: #{baseline_forward.1} parent=1 // loop_body
      %s31 = ssub.s32 %s26, 1
      %s32 = ssub.s32 %s26, 2
      %s33 = sadd.s32 %s26, 1
      %s34 = ssub.s32 %s26, %s33
      %p35 = scmp.eq.s32.totalorder %s34, 0
      %s37 = sadd.s32 %s36, 1
      %s38 = scalar_select %p35, %s36, %s37
      %p41 = pneg %p35
      %p42 = scmp.eq.s32.totalorder %s26, 1
      %p43 = por %p41, %p42
      %p44 = scmp.ne.s32.totalorder %s36, %s39
      %p45 = scmp.eq.s32.totalorder %s26, 0
      %p46 = por %p44, %p45
      %p47 = scmp.ne.s32.totalorder %s36, %s39
      %p48 = scmp.eq.s32.totalorder %s31, 1
      %p49 = por %p47, %p48
      %p50 = scmp.ne.s32.totalorder %s39, %s40
      %p51 = scmp.eq.s32.totalorder %s31, 0
      %p52 = por %p50, %p51
      %p53 = scmp.ne.s32.totalorder %s39, %s40
      %p54 = scmp.eq.s32.totalorder %s32, 1
      %p55 = por %p53, %p54
      %p57 = scmp.ne.s32.totalorder %s40, %s56
      %p58 = scmp.eq.s32.totalorder %s32, 0
      %p59 = por %p57, %p58
      %s61 = sadd.s32 %s60, 1
      %p64 = scmp.eq.s32.totalorder %s26, 1
      %p65 = scmp.ne.s32.totalorder %s60, %s62
      %p66 = scmp.eq.s32.totalorder %s26, 0
      %p67 = por %p65, %p66
      %p68 = scmp.ne.s32.totalorder %s60, %s62
      %p69 = scmp.eq.s32.totalorder %s31, 1
      %p70 = por %p68, %p69
      %p71 = scmp.ne.s32.totalorder %s62, %s63
      %p72 = scmp.eq.s32.totalorder %s31, 0
      %p73 = por %p71, %p72
      %p74 = scmp.ne.s32.totalorder %s62, %s63
      %p75 = scmp.eq.s32.totalorder %s32, 1
      %p76 = por %p74, %p75
      %p78 = scmp.ne.s32.totalorder %s63, %s77
      %p79 = scmp.eq.s32.totalorder %s32, 0
      %p80 = por %p78, %p79
      %s82 = sadd.s32 %s81, 1
      %p85 = scmp.eq.s32.totalorder %s26, 1
      %p86 = scmp.ne.s32.totalorder %s81, %s83
      %p87 = scmp.eq.s32.totalorder %s26, 0
      %p88 = por %p86, %p87
      %p89 = scmp.ne.s32.totalorder %s81, %s83
      %p90 = scmp.eq.s32.totalorder %s31, 1
      %p91 = por %p89, %p90
      %p92 = scmp.ne.s32.totalorder %s83, %s84
      %p93 = scmp.eq.s32.totalorder %s31, 0
      %p94 = por %p92, %p93
      %p95 = scmp.ne.s32.totalorder %s83, %s84
      %p96 = scmp.eq.s32.totalorder %s32, 1
      %p97 = por %p95, %p96
      %p99 = scmp.ne.s32.totalorder %s84, %s98
      %p100 = scmp.eq.s32.totalorder %s32, 0
      %p101 = por %p99, %p100
      %s103 = sadd.s32 %s102, 1
      %p106 = scmp.eq.s32.totalorder %s26, 1
      %p107 = scmp.ne.s32.totalorder %s102, %s104
      %p108 = scmp.eq.s32.totalorder %s26, 0
      %p109 = por %p107, %p108
      %p110 = scmp.ne.s32.totalorder %s102, %s104
      %p111 = scmp.eq.s32.totalorder %s31, 1
      %p112 = por %p110, %p111
      %p113 = scmp.ne.s32.totalorder %s104, %s105
      %p114 = scmp.eq.s32.totalorder %s31, 0
      %p115 = por %p113, %p114
      %p116 = scmp.ne.s32.totalorder %s104, %s105
      %p117 = scmp.eq.s32.totalorder %s32, 1
      %p118 = por %p116, %p117
      %p120 = scmp.ne.s32.totalorder %s105, %s119
      %p121 = scmp.eq.s32.totalorder %s32, 0
      %p122 = por %p120, %p121
      %s124 = sadd.s32 %s123, 1
      %p127 = scmp.eq.s32.totalorder %s26, 1
      %p128 = scmp.ne.s32.totalorder %s123, %s125
      %p129 = scmp.eq.s32.totalorder %s26, 0
      %p130 = por %p128, %p129
      %p131 = scmp.ne.s32.totalorder %s123, %s125
      %p132 = scmp.eq.s32.totalorder %s31, 1
      %p133 = por %p131, %p132
      %p134 = scmp.ne.s32.totalorder %s125, %s126
      %p135 = scmp.eq.s32.totalorder %s31, 0
      %p136 = por %p134, %p135
      %p137 = scmp.ne.s32.totalorder %s125, %s126
      %p138 = scmp.eq.s32.totalorder %s32, 1
      %p139 = por %p137, %p138
      %p141 = scmp.ne.s32.totalorder %s126, %s140
      %p142 = scmp.eq.s32.totalorder %s32, 0
      %p143 = por %p141, %p142
      %s145 = sadd.s32 %s144, 1
      %p148 = scmp.eq.s32.totalorder %s26, 1
      %p149 = scmp.ne.s32.totalorder %s144, %s146
      %p150 = scmp.eq.s32.totalorder %s26, 0
      %p151 = por %p149, %p150
      %p152 = scmp.ne.s32.totalorder %s144, %s146
      %p153 = scmp.eq.s32.totalorder %s31, 1
      %p154 = por %p152, %p153
      %p155 = scmp.ne.s32.totalorder %s146, %s147
      %p156 = scmp.eq.s32.totalorder %s31, 0
      %p157 = por %p155, %p156
      %p158 = scmp.ne.s32.totalorder %s146, %s147
      %p159 = scmp.eq.s32.totalorder %s32, 1
      %p160 = por %p158, %p159
      %p162 = scmp.ne.s32.totalorder %s147, %s161
      %p163 = scmp.eq.s32.totalorder %s32, 0
      %p164 = por %p162, %p163
      %s166 = sadd.s32 %s165, 1
      %p169 = scmp.eq.s32.totalorder %s26, 1
      %p170 = scmp.ne.s32.totalorder %s165, %s167
      %p171 = scmp.eq.s32.totalorder %s26, 0
      %p172 = por %p170, %p171
      %p173 = scmp.ne.s32.totalorder %s165, %s167
      %p174 = scmp.eq.s32.totalorder %s31, 1
      %p175 = por %p173, %p174
      %p176 = scmp.ne.s32.totalorder %s167, %s168
      %p177 = scmp.eq.s32.totalorder %s31, 0
      %p178 = por %p176, %p177
      %p179 = scmp.ne.s32.totalorder %s167, %s168
      %p180 = scmp.eq.s32.totalorder %s32, 1
      %p181 = por %p179, %p180
      %p183 = scmp.ne.s32.totalorder %s168, %s182
      %p184 = scmp.eq.s32.totalorder %s32, 0
      %p185 = por %p183, %p184
      %s187 = sadd.s32 %s186, 1
      %p190 = scmp.eq.s32.totalorder %s26, 1
      %p191 = scmp.ne.s32.totalorder %s186, %s188
      %p192 = scmp.eq.s32.totalorder %s26, 0
      %p193 = por %p191, %p192
      %p194 = scmp.ne.s32.totalorder %s186, %s188
      %p195 = scmp.eq.s32.totalorder %s31, 1
      %p196 = por %p194, %p195
      %p197 = scmp.ne.s32.totalorder %s188, %s189
      %p198 = scmp.eq.s32.totalorder %s31, 0
      %p199 = por %p197, %p198
      %p200 = scmp.ne.s32.totalorder %s188, %s189
      %p201 = scmp.eq.s32.totalorder %s32, 1
      %p202 = por %p200, %p201
      %p204 = scmp.ne.s32.totalorder %s189, %s203
      %p205 = scmp.eq.s32.totalorder %s32, 0
      %p206 = por %p204, %p205
      %s208 = sadd.s32 %s207, 1
      %p211 = scmp.eq.s32.totalorder %s26, 1
      %p212 = scmp.ne.s32.totalorder %s207, %s209
      %p213 = scmp.eq.s32.totalorder %s26, 0
      %p214 = por %p212, %p213
      %p215 = scmp.ne.s32.totalorder %s207, %s209
      %p216 = scmp.eq.s32.totalorder %s31, 1
      %p217 = por %p215, %p216
      %p218 = scmp.ne.s32.totalorder %s209, %s210
      %p219 = scmp.eq.s32.totalorder %s31, 0
      %p220 = por %p218, %p219
      %p221 = scmp.ne.s32.totalorder %s209, %s210
      %p222 = scmp.eq.s32.totalorder %s32, 1
      %p223 = por %p221, %p222
      %p225 = scmp.ne.s32.totalorder %s210, %s224
      %p226 = scmp.eq.s32.totalorder %s32, 0
      %p227 = por %p225, %p226
      %s229 = sadd.s32 %s228, 1
      %p232 = scmp.eq.s32.totalorder %s26, 1
      %p233 = scmp.ne.s32.totalorder %s228, %s230
      %p234 = scmp.eq.s32.totalorder %s26, 0
      %p235 = por %p233, %p234
      %p236 = scmp.ne.s32.totalorder %s228, %s230
      %p237 = scmp.eq.s32.totalorder %s31, 1
      %p238 = por %p236, %p237
      %p239 = scmp.ne.s32.totalorder %s230, %s231
      %p240 = scmp.eq.s32.totalorder %s31, 0
      %p241 = por %p239, %p240
      %p242 = scmp.ne.s32.totalorder %s230, %s231
      %p243 = scmp.eq.s32.totalorder %s32, 1
      %p244 = por %p242, %p243
      %p246 = scmp.ne.s32.totalorder %s231, %s245
      %p247 = scmp.eq.s32.totalorder %s32, 0
      %p248 = por %p246, %p247
      %s250 = sadd.s32 %s249, 1
      %p253 = scmp.eq.s32.totalorder %s26, 1
      %p254 = scmp.ne.s32.totalorder %s249, %s251
      %p255 = scmp.eq.s32.totalorder %s26, 0
      %p256 = por %p254, %p255
      %p257 = scmp.ne.s32.totalorder %s249, %s251
      %p258 = scmp.eq.s32.totalorder %s31, 1
      %p259 = por %p257, %p258
      %p260 = scmp.ne.s32.totalorder %s251, %s252
      %p261 = scmp.eq.s32.totalorder %s31, 0
      %p262 = por %p260, %p261
      %p263 = scmp.ne.s32.totalorder %s251, %s252
      %p264 = scmp.eq.s32.totalorder %s32, 1
      %p265 = por %p263, %p264
      %p267 = scmp.ne.s32.totalorder %s252, %s266
      %p268 = scmp.eq.s32.totalorder %s32, 0
      %p269 = por %p267, %p268
      %s271 = sadd.s32 %s270, 1
      %p274 = scmp.eq.s32.totalorder %s26, 1
      %p275 = scmp.ne.s32.totalorder %s270, %s272
      %p276 = scmp.eq.s32.totalorder %s26, 0
      %p277 = por %p275, %p276
      %p278 = scmp.ne.s32.totalorder %s270, %s272
      %p279 = scmp.eq.s32.totalorder %s31, 1
      %p280 = por %p278, %p279
      %p281 = scmp.ne.s32.totalorder %s272, %s273
      %p282 = scmp.eq.s32.totalorder %s31, 0
      %p283 = por %p281, %p282
      %p284 = scmp.ne.s32.totalorder %s272, %s273
      %p285 = scmp.eq.s32.totalorder %s32, 1
      %p286 = por %p284, %p285
      %p288 = scmp.ne.s32.totalorder %s273, %s287
      %p289 = scmp.eq.s32.totalorder %s32, 0
      %p290 = por %p288, %p289
      %s292 = sadd.s32 %s291, 1
      %p295 = scmp.eq.s32.totalorder %s26, 1
      %p296 = scmp.ne.s32.totalorder %s291, %s293
      %p297 = scmp.eq.s32.totalorder %s26, 0
      %p298 = por %p296, %p297
      %p299 = scmp.ne.s32.totalorder %s291, %s293
      %p300 = scmp.eq.s32.totalorder %s31, 1
      %p301 = por %p299, %p300
      %p302 = scmp.ne.s32.totalorder %s293, %s294
      %p303 = scmp.eq.s32.totalorder %s31, 0
      %p304 = por %p302, %p303
      %p305 = scmp.ne.s32.totalorder %s293, %s294
      %p306 = scmp.eq.s32.totalorder %s32, 1
      %p307 = por %p305, %p306
      %p309 = scmp.ne.s32.totalorder %s294, %s308
      %p310 = scmp.eq.s32.totalorder %s32, 0
      %p311 = por %p309, %p310
      %s312 = ssub.s32 %s26, %s33
      %p313 = scmp.eq.s32.totalorder %s312, 0
      %s315 = sadd.s32 %s314, 1
      %s316 = scalar_select %p313, %s314, %s315
      %p319 = pneg %p313
      %p320 = scmp.eq.s32.totalorder %s26, 1
      %p321 = por %p319, %p320
      %p322 = scmp.ne.s32.totalorder %s314, %s317
      %p323 = scmp.eq.s32.totalorder %s26, 0
      %p324 = por %p322, %p323
      %p325 = scmp.ne.s32.totalorder %s314, %s317
      %p326 = scmp.eq.s32.totalorder %s31, 1
      %p327 = por %p325, %p326
      %p328 = scmp.ne.s32.totalorder %s317, %s318
      %p329 = scmp.eq.s32.totalorder %s31, 0
      %p330 = por %p328, %p329
      %p331 = scmp.ne.s32.totalorder %s317, %s318
      %p332 = scmp.eq.s32.totalorder %s32, 1
      %p333 = por %p331, %p332
      %p335 = scmp.ne.s32.totalorder %s318, %s334
      %p336 = scmp.eq.s32.totalorder %s32, 0
      %p337 = por %p335, %p336
      %p338 = scmp.le.s32.totalorder 1, %s26
      %p339 = scmp.lt.s32.totalorder %s26, 3
      %p340 = pnand %p338, %p339
      %p341 = pneg %p340
      // Predicated region
      $region9: #{baseline_forward.1} parent=5 // pred_check
        _
      $region10: #{baseline_forward.1} parent=5 // pred_check_branch
        %343 = sbr.rel (%p340) target = $region12
      $region11: #{baseline_forward.1} parent=5 // pred_region
        %s344 = ssub.s32 %s26, 1
        // Predicated region
        $region13: #{baseline_forward.1} parent=11 // pred_check
          %p345 = pneg %p73
        $region14: #{baseline_forward.1} parent=11 // pred_check_branch
          %347 = sbr.rel (%p345) target = $region16
        $region15: #{baseline_forward.1} parent=11 // pred_region
          _
        $region16: #{baseline_forward.1} parent=11 // pred_fallthru
          _
        // Predicated region
        $region17: #{baseline_forward.1} parent=11 // pred_check
          %p348 = pneg %p94
        $region18: #{baseline_forward.1} parent=11 // pred_check_branch
          %350 = sbr.rel (%p348) target = $region20
        $region19: #{baseline_forward.1} parent=11 // pred_region
          _
        $region20: #{baseline_forward.1} parent=11 // pred_fallthru
          _
        // Predicated region
        $region21: #{baseline_forward.1} parent=11 // pred_check
          %p351 = pneg %p115
        $region22: #{baseline_forward.1} parent=11 // pred_check_branch
          %353 = sbr.rel (%p351) target = $region24
        $region23: #{baseline_forward.1} parent=11 // pred_region
          _
        $region24: #{baseline_forward.1} parent=11 // pred_fallthru
          _
        // Predicated region
        $region25: #{baseline_forward.1} parent=11 // pred_check
          %p354 = pneg %p136
        $region26: #{baseline_forward.1} parent=11 // pred_check_branch
          %356 = sbr.rel (%p354) target = $region28
        $region27: #{baseline_forward.1} parent=11 // pred_region
          _
        $region28: #{baseline_forward.1} parent=11 // pred_fallthru
          _
        // Predicated region
        $region29: #{baseline_forward.1} parent=11 // pred_check
          %p357 = pneg %p157
        $region30: #{baseline_forward.1} parent=11 // pred_check_branch
          %359 = sbr.rel (%p357) target = $region32
        $region31: #{baseline_forward.1} parent=11 // pred_region
          _
        $region32: #{baseline_forward.1} parent=11 // pred_fallthru
          _
        // Predicated region
        $region33: #{baseline_forward.1} parent=11 // pred_check
          %p360 = pneg %p178
        $region34: #{baseline_forward.1} parent=11 // pred_check_branch
          %362 = sbr.rel (%p360) target = $region36
        $region35: #{baseline_forward.1} parent=11 // pred_region
          _
        $region36: #{baseline_forward.1} parent=11 // pred_fallthru
          _
        // Predicated region
        $region37: #{baseline_forward.1} parent=11 // pred_check
          %p363 = pneg %p199
        $region38: #{baseline_forward.1} parent=11 // pred_check_branch
          %365 = sbr.rel (%p363) target = $region40
        $region39: #{baseline_forward.1} parent=11 // pred_region
          _
        $region40: #{baseline_forward.1} parent=11 // pred_fallthru
          _
        // Predicated region
        $region41: #{baseline_forward.1} parent=11 // pred_check
          %p366 = pneg %p220
        $region42: #{baseline_forward.1} parent=11 // pred_check_branch
          %368 = sbr.rel (%p366) target = $region44
        $region43: #{baseline_forward.1} parent=11 // pred_region
          _
        $region44: #{baseline_forward.1} parent=11 // pred_fallthru
          _
        // Predicated region
        $region45: #{baseline_forward.1} parent=11 // pred_check
          %p369 = pneg %p241
        $region46: #{baseline_forward.1} parent=11 // pred_check_branch
          %371 = sbr.rel (%p369) target = $region48
        $region47: #{baseline_forward.1} parent=11 // pred_region
          _
        $region48: #{baseline_forward.1} parent=11 // pred_fallthru
          _
        // Predicated region
        $region49: #{baseline_forward.1} parent=11 // pred_check
          %p372 = pneg %p262
        $region50: #{baseline_forward.1} parent=11 // pred_check_branch
          %374 = sbr.rel (%p372) target = $region52
        $region51: #{baseline_forward.1} parent=11 // pred_region
          _
        $region52: #{baseline_forward.1} parent=11 // pred_fallthru
          _
        // Predicated region
        $region53: #{baseline_forward.1} parent=11 // pred_check
          %p375 = pneg %p283
        $region54: #{baseline_forward.1} parent=11 // pred_check_branch
          %377 = sbr.rel (%p375) target = $region56
        $region55: #{baseline_forward.1} parent=11 // pred_region
          _
        $region56: #{baseline_forward.1} parent=11 // pred_fallthru
          _
        // Predicated region
        $region57: #{baseline_forward.1} parent=11 // pred_check
          %p378 = pneg %p304
        $region58: #{baseline_forward.1} parent=11 // pred_check_branch
          %380 = sbr.rel (%p378) target = $region60
        $region59: #{baseline_forward.1} parent=11 // pred_region
          _
        $region60: #{baseline_forward.1} parent=11 // pred_fallthru
          _
      $region12: #{baseline_forward.1} parent=5 // pred_fallthru
        _
      %p381 = scmp.lt.s32.totalorder %s26, 2
      // Predicated region
      $region61: #{baseline_forward.1} parent=5 // pred_check
        %p382 = pneg %p381
      $region62: #{baseline_forward.1} parent=5 // pred_check_branch
        %384 = sbr.rel (%p382) target = $region64
      $region63: #{baseline_forward.1} parent=5 // pred_region
        // Predicated region
        $region65: #{baseline_forward.1} parent=63 // pred_check
          %p385 = pneg %p46
        $region66: #{baseline_forward.1} parent=63 // pred_check_branch
          %387 = sbr.rel (%p385) target = $region68
        $region67: #{baseline_forward.1} parent=63 // pred_region
          %p388 = scmp.lt.s32.totalorder %s26, 1
          %s389 = scalar_select %p388, %s26, 1
          %s390 = smul.addr %s389, 6
          %s391 = smul.addr %s390, 8
          %s392 = scalar_lea.vmem %s0, %s391
        $region68: #{baseline_forward.1} parent=63 // pred_fallthru
          _
      $region64: #{baseline_forward.1} parent=5 // pred_fallthru
        _
      %p393 = scmp.le.s32.totalorder 1, %s26
      %p394 = scmp.lt.s32.totalorder %s26, 3
      %p395 = pnand %p393, %p394
      %p396 = pneg %p395
      // Predicated region
      $region69: #{baseline_forward.1} parent=5 // pred_check
        _
      $region70: #{baseline_forward.1} parent=5 // pred_check_branch
        %398 = sbr.rel (%p395) target = $region72
      $region71: #{baseline_forward.1} parent=5 // pred_region
        %s399 = ssub.s32 %s26, 1
        %p400 = scmp.lt.s32.totalorder %s31, 1
        %s401 = scalar_select %p400, %s31, 1
        %s402 = smul.addr %s401, 6
        %s403 = smul.addr %s402, 8
        %s404 = scalar_lea.vmem %s0, %s403
        %p405 = pneg %p52
        %p406 = pneg %p49
        %p407 = pneg %p73
        %p408 = pneg %p70
        %p409 = pneg %p94
        %p410 = pneg %p91
        %p411 = pneg %p115
        %p412 = pneg %p112
        %p413 = pneg %p136
        %p414 = pneg %p133
        %p415 = pneg %p157
        %p416 = pneg %p154
        %p417 = pneg %p178
        %p418 = pneg %p175
        %p419 = pneg %p199
        %p420 = pneg %p196
        %p421 = pneg %p220
        %p422 = pneg %p217
        %p423 = pneg %p241
        %p424 = pneg %p238
        %p425 = pneg %p262
        %p426 = pneg %p259
        %p427 = pneg %p283
        %p428 = pneg %p280
        %p429 = pneg %p304
        %p430 = pneg %p301
        %p431 = pneg %p330
        %p432 = pneg %p327
        %s433 = sand.u32 %s317, 1
        %s434 = scalar_lea.sflag [#allocation6], %s433
        %s435 = sand.u32 %s317, 1
        %s436 = scalar_lea.vmem [#allocation5], %s435
        %p437 = scmp.lt.s32.totalorder %s31, 1
        %s438 = scalar_select %p437, %s31, 1
        %s439 = smul.addr %s438, 6
        %s440 = smul.addr %s439, 8
        %s441 = scalar_lea.vmem %s0, %s440
        %v443 = vld [vmem:[%s441] sm:$0xff]
        %v444 = vld [vmem:[%s441 + $0x8] sm:$0xff]
        %v445 = vld [vmem:[%s441 + $0x10] sm:$0xff]
        %v446 = vld [vmem:[%s441 + $0x18] sm:$0xff]
        %v447 = vld [vmem:[%s441 + $0x20] sm:$0x3]
        %v448 = vld [vmem:[%s441 + $0x28] sm:$0x3]
        %vm455 = vcmask 1046528
        %v456 = vrot.slane %v443, 1
        %v457 = vrot.slane %v445, 1
        %v458 = vsel %vm455, %v456, %v457
        %v459 = vrot.slane %v444, 1
        %v460 = vrot.slane %v446, 1
        %v461 = vsel %vm455, %v459, %v460
        %v462 = vrot.slane %v447, 1
        %v463 = vsel %vm455, %v457, %v462
        %v464 = vrot.slane %v448, 1
        %v465 = vsel %vm455, %v460, %v464
        %v472 = vpack.c.bf16 %v445, %v443
        %v473 = vpack.c.bf16 %v446, %v444
        %v474 = vpack.c.bf16 %v463, %v458
        %v475 = vpack.c.bf16 %v465, %v461
        %v476 = vpack.c.bf16 %v447, %v447
        %v477 = vpack.c.bf16 %v448, %v448
        %v478 = vpack.c.bf16 %v462, %v462
        %v479 = vpack.c.bf16 %v464, %v464
        %v480 = vld [vmem:[%s1] sm:$0xff]
        %v481 = vld [vmem:[%s1 + $0x8] sm:$0xff]
        %v482 = vld [vmem:[%s1 + $0x10] sm:$0xf]
        %v483 = vld [vmem:[%s1 + $0x14] sm:$0xff]
        %v484 = vld [vmem:[%s1 + $0x1c] sm:$0xff]
        %v485 = vld [vmem:[%s1 + $0x24] sm:$0xf]
        %v486 = vld [vmem:[%s1 + $0x28] sm:$0xff]
        %v487 = vld [vmem:[%s1 + $0x30] sm:$0xff]
        %v488 = vld [vmem:[%s1 + $0x38] sm:$0xf]
        %v489 = vld [vmem:[%s1 + $0x3c] sm:$0xff]
        %v490 = vld [vmem:[%s1 + $0x44] sm:$0xff]
        %v491 = vld [vmem:[%s1 + $0x4c] sm:$0xf]
        %v492 = vld [vmem:[%s1 + $0x50] sm:$0xff]
        %v493 = vld [vmem:[%s1 + $0x58] sm:$0xff]
        %v494 = vld [vmem:[%s1 + $0x60] sm:$0xf]
        %v495 = vld [vmem:[%s1 + $0x64] sm:$0xff]
        %v496 = vld [vmem:[%s1 + $0x6c] sm:$0xff]
        %v497 = vld [vmem:[%s1 + $0x74] sm:$0xf]
        %v498 = vld [vmem:[%s1 + $0x78] sm:$0xff]
        %v499 = vld [vmem:[%s1 + $0x80] sm:$0xff]
        %v500 = vld [vmem:[%s1 + $0x88] sm:$0xf]
        %v501 = vld [vmem:[%s1 + $0x8c] sm:$0xff]
        %v502 = vld [vmem:[%s1 + $0x94] sm:$0xff]
        %v503 = vld [vmem:[%s1 + $0x9c] sm:$0xf]
        %v504 = vld [vmem:[%s1 + $0xa0] sm:$0xff]
        %v505 = vld [vmem:[%s1 + $0xa8] sm:$0xff]
        %v506 = vld [vmem:[%s1 + $0xb0] sm:$0xf]
        %v507 = vld [vmem:[%s1 + $0xb4] sm:$0xff]
        %v508 = vld [vmem:[%s1 + $0xbc] sm:$0xff]
        %v509 = vld [vmem:[%s1 + $0xc4] sm:$0xf]
        %v510 = vld [vmem:[%s1 + $0xc8] sm:$0xff]
        %v511 = vld [vmem:[%s1 + $0xd0] sm:$0xff]
        %v512 = vld [vmem:[%s1 + $0xd8] sm:$0xf]
        %v513 = vld [vmem:[%s1 + $0xdc] sm:$0xff]
        %v514 = vld [vmem:[%s1 + $0xe4] sm:$0xff]
        %v515 = vld [vmem:[%s1 + $0xec] sm:$0xf]
        %v516 = vld [vmem:[%s1 + $0xf0] sm:$0xff]
        %v517 = vld [vmem:[%s1 + $0xf8] sm:$0xff]
        %v518 = vld [vmem:[%s1 + $0x100] sm:$0xf]
        %v519 = vld [vmem:[%s1 + $0x104] sm:$0xff]
        %v520 = vld [vmem:[%s1 + $0x10c] sm:$0xff]
        %v521 = vld [vmem:[%s1 + $0x114] sm:$0xf]
        %v522 = vld [vmem:[%s1 + $0x118] sm:$0xff]
        %v523 = vld [vmem:[%s1 + $0x120] sm:$0xff]
        %v524 = vld [vmem:[%s1 + $0x128] sm:$0xf]
        %v525 = vld [vmem:[%s1 + $0x12c] sm:$0xff]
        %v526 = vld [vmem:[%s1 + $0x134] sm:$0xff]
        %v527 = vld [vmem:[%s1 + $0x13c] sm:$0xf]
        %v528 = vld [vmem:[%s1 + $0x140] sm:$0xff]
        %v529 = vld [vmem:[%s1 + $0x148] sm:$0xff]
        %v530 = vld [vmem:[%s1 + $0x150] sm:$0xf]
        %v531 = vld [vmem:[%s1 + $0x154] sm:$0xff]
        %v532 = vld [vmem:[%s1 + $0x15c] sm:$0xff]
        %v533 = vld [vmem:[%s1 + $0x164] sm:$0xf]
        %v534 = vld [vmem:[%s1 + $0x168] sm:$0xff]
        %v535 = vld [vmem:[%s1 + $0x170] sm:$0xff]
        %v536 = vld [vmem:[%s1 + $0x178] sm:$0xf]
        %v537 = vld [vmem:[%s1 + $0x17c] sm:$0xff]
        %v538 = vld [vmem:[%s1 + $0x184] sm:$0xff]
        %v539 = vld [vmem:[%s1 + $0x18c] sm:$0xf]
        %v540 = vld [vmem:[%s1 + $0x190] sm:$0xff]
        %v541 = vld [vmem:[%s1 + $0x198] sm:$0xff]
        %v542 = vld [vmem:[%s1 + $0x1a0] sm:$0xf]
        %v543 = vld [vmem:[%s1 + $0x1a4] sm:$0xff]
        %v544 = vld [vmem:[%s1 + $0x1ac] sm:$0xff]
        %v545 = vld [vmem:[%s1 + $0x1b4] sm:$0xf]
        %v546 = vld [vmem:[%s1 + $0x1b8] sm:$0xff]
        %v547 = vld [vmem:[%s1 + $0x1c0] sm:$0xff]
        %v548 = vld [vmem:[%s1 + $0x1c8] sm:$0xf]
        %v549 = vld [vmem:[%s1 + $0x1cc] sm:$0xff]
        %v550 = vld [vmem:[%s1 + $0x1d4] sm:$0xff]
        %v551 = vld [vmem:[%s1 + $0x1dc] sm:$0xf]
        %v552 = vld [vmem:[%s1 + $0x1e0] sm:$0xff]
        %v553 = vld [vmem:[%s1 + $0x1e8] sm:$0xff]
        %v554 = vld [vmem:[%s1 + $0x1f0] sm:$0xf]
        %v555 = vld [vmem:[%s1 + $0x1f4] sm:$0xff]
        %v556 = vld [vmem:[%s1 + $0x1fc] sm:$0xff]
        %v557 = vld [vmem:[%s1 + $0x204] sm:$0xf]
        %v558 = vld [vmem:[%s1 + $0x208] sm:$0xff]
        %v559 = vld [vmem:[%s1 + $0x210] sm:$0xff]
        %v560 = vld [vmem:[%s1 + $0x218] sm:$0xf]
        %v561 = vld [vmem:[%s1 + $0x21c] sm:$0xff]
        %v562 = vld [vmem:[%s1 + $0x224] sm:$0xff]
        %v563 = vld [vmem:[%s1 + $0x22c] sm:$0xf]
        %v564 = vld [vmem:[%s1 + $0x230] sm:$0xff]
        %v565 = vld [vmem:[%s1 + $0x238] sm:$0xff]
        %v566 = vld [vmem:[%s1 + $0x240] sm:$0xf]
        %v567 = vld [vmem:[%s1 + $0x244] sm:$0xff]
        %v568 = vld [vmem:[%s1 + $0x24c] sm:$0xff]
        %v569 = vld [vmem:[%s1 + $0x254] sm:$0xf]
        %v570 = vld [vmem:[%s1 + $0x258] sm:$0xff]
        %v571 = vld [vmem:[%s1 + $0x260] sm:$0xff]
        %v572 = vld [vmem:[%s1 + $0x268] sm:$0xf]
        %v573 = vld [vmem:[%s1 + $0x26c] sm:$0xff]
        %v574 = vld [vmem:[%s1 + $0x274] sm:$0xff]
        %v575 = vld [vmem:[%s1 + $0x27c] sm:$0xf]
        %v576 = vld [vmem:[%s1 + $0x280] sm:$0xff]
        %v577 = vld [vmem:[%s1 + $0x288] sm:$0xff]
        %v578 = vld [vmem:[%s1 + $0x290] sm:$0xf]
        %v579 = vld [vmem:[%s1 + $0x294] sm:$0xff]
        %v580 = vld [vmem:[%s1 + $0x29c] sm:$0xff]
        %v581 = vld [vmem:[%s1 + $0x2a4] sm:$0xf]
        %v582 = vld [vmem:[%s1 + $0x2a8] sm:$0xff]
        %v583 = vld [vmem:[%s1 + $0x2b0] sm:$0xff]
        %v584 = vld [vmem:[%s1 + $0x2b8] sm:$0xf]
        %v585 = vld [vmem:[%s1 + $0x2bc] sm:$0xff]
        %v586 = vld [vmem:[%s1 + $0x2c4] sm:$0xff]
        %v587 = vld [vmem:[%s1 + $0x2cc] sm:$0xf]
        %v588 = vld [vmem:[%s1 + $0x2d0] sm:$0xff]
        %v589 = vld [vmem:[%s1 + $0x2d8] sm:$0xff]
        %v590 = vld [vmem:[%s1 + $0x2e0] sm:$0xf]
        %v591 = vld [vmem:[%s1 + $0x2e4] sm:$0xff]
        %v592 = vld [vmem:[%s1 + $0x2ec] sm:$0xff]
        %v593 = vld [vmem:[%s1 + $0x2f4] sm:$0xf]
        %v594 = vld [vmem:[%s1 + $0x2f8] sm:$0xff]
        %v595 = vld [vmem:[%s1 + $0x300] sm:$0xff]
        %v596 = vld [vmem:[%s1 + $0x308] sm:$0xf]
        %v597 = vld [vmem:[%s1 + $0x30c] sm:$0xff]
        %v598 = vld [vmem:[%s1 + $0x314] sm:$0xff]
        %v599 = vld [vmem:[%s1 + $0x31c] sm:$0xf]
        %v600 = vld [vmem:[%s1 + $0x320] sm:$0xff]
        %v601 = vld [vmem:[%s1 + $0x328] sm:$0xff]
        %v602 = vld [vmem:[%s1 + $0x330] sm:$0xf]
        %v603 = vld [vmem:[%s1 + $0x334] sm:$0xff]
        %v604 = vld [vmem:[%s1 + $0x33c] sm:$0xff]
        %v605 = vld [vmem:[%s1 + $0x344] sm:$0xf]
        %v606 = vld [vmem:[%s1 + $0x348] sm:$0xff]
        %v607 = vld [vmem:[%s1 + $0x350] sm:$0xff]
        %v608 = vld [vmem:[%s1 + $0x358] sm:$0xf]
        %v609 = vld [vmem:[%s1 + $0x35c] sm:$0xff]
        %v610 = vld [vmem:[%s1 + $0x364] sm:$0xff]
        %v611 = vld [vmem:[%s1 + $0x36c] sm:$0xf]
        %v612 = vld [vmem:[%s1 + $0x370] sm:$0xff]
        %v613 = vld [vmem:[%s1 + $0x378] sm:$0xff]
        %v614 = vld [vmem:[%s1 + $0x380] sm:$0xf]
        %v615 = vld [vmem:[%s1 + $0x384] sm:$0xff]
        %v616 = vld [vmem:[%s1 + $0x38c] sm:$0xff]
        %v617 = vld [vmem:[%s1 + $0x394] sm:$0xf]
        %v618 = vld [vmem:[%s1 + $0x398] sm:$0xff]
        %v619 = vld [vmem:[%s1 + $0x3a0] sm:$0xff]
        %v620 = vld [vmem:[%s1 + $0x3a8] sm:$0xf]
        %v621 = vld [vmem:[%s1 + $0x3ac] sm:$0xff]
        %v622 = vld [vmem:[%s1 + $0x3b4] sm:$0xff]
        %v623 = vld [vmem:[%s1 + $0x3bc] sm:$0xf]
        %v624 = vld [vmem:[%s1 + $0x3c0] sm:$0xff]
        %v625 = vld [vmem:[%s1 + $0x3c8] sm:$0xff]
        %v626 = vld [vmem:[%s1 + $0x3d0] sm:$0xf]
        %v627 = vld [vmem:[%s1 + $0x3d4] sm:$0xff]
        %v628 = vld [vmem:[%s1 + $0x3dc] sm:$0xff]
        %v629 = vld [vmem:[%s1 + $0x3e4] sm:$0xf]
        %v630 = vld [vmem:[%s1 + $0x3e8] sm:$0xff]
        %v631 = vld [vmem:[%s1 + $0x3f0] sm:$0xff]
        %v632 = vld [vmem:[%s1 + $0x3f8] sm:$0xf]
        %v633 = vld [vmem:[%s1 + $0x3fc] sm:$0xff]
        %v634 = vld [vmem:[%s1 + $0x404] sm:$0xff]
        %v635 = vld [vmem:[%s1 + $0x40c] sm:$0xf]
        %v636 = vld [vmem:[%s1 + $0x410] sm:$0xff]
        %v637 = vld [vmem:[%s1 + $0x418] sm:$0xff]
        %v638 = vld [vmem:[%s1 + $0x420] sm:$0xf]
        %v639 = vld [vmem:[%s1 + $0x424] sm:$0xff]
        %v640 = vld [vmem:[%s1 + $0x42c] sm:$0xff]
        %v641 = vld [vmem:[%s1 + $0x434] sm:$0xf]
        %v642 = vld [vmem:[%s1 + $0x438] sm:$0xff]
        %v643 = vld [vmem:[%s1 + $0x440] sm:$0xff]
        %v644 = vld [vmem:[%s1 + $0x448] sm:$0xf]
        %v645 = vld [vmem:[%s1 + $0x44c] sm:$0xff]
        %v646 = vld [vmem:[%s1 + $0x454] sm:$0xff]
        %v647 = vld [vmem:[%s1 + $0x45c] sm:$0xf]
        %v648 = vld [vmem:[%s1 + $0x460] sm:$0xff]
        %v649 = vld [vmem:[%s1 + $0x468] sm:$0xff]
        %v650 = vld [vmem:[%s1 + $0x470] sm:$0xf]
        %v651 = vld [vmem:[%s1 + $0x474] sm:$0xff]
        %v652 = vld [vmem:[%s1 + $0x47c] sm:$0xff]
        %v653 = vld [vmem:[%s1 + $0x484] sm:$0xf]
        %v654 = vld [vmem:[%s1 + $0x488] sm:$0xff]
        %v655 = vld [vmem:[%s1 + $0x490] sm:$0xff]
        %v656 = vld [vmem:[%s1 + $0x498] sm:$0xf]
        %v657 = vld [vmem:[%s1 + $0x49c] sm:$0xff]
        %v658 = vld [vmem:[%s1 + $0x4a4] sm:$0xff]
        %v659 = vld [vmem:[%s1 + $0x4ac] sm:$0xf]
        %v660 = vld [vmem:[%s1 + $0x4b0] sm:$0xff]
        %v661 = vld [vmem:[%s1 + $0x4b8] sm:$0xff]
        %v662 = vld [vmem:[%s1 + $0x4c0] sm:$0xf]
        %v663 = vld [vmem:[%s1 + $0x4c4] sm:$0xff]
        %v664 = vld [vmem:[%s1 + $0x4cc] sm:$0xff]
        %v665 = vld [vmem:[%s1 + $0x4d4] sm:$0xf]
        %v666 = vld [vmem:[%s1 + $0x4d8] sm:$0xff]
        %v667 = vld [vmem:[%s1 + $0x4e0] sm:$0xff]
        %v668 = vld [vmem:[%s1 + $0x4e8] sm:$0xf]
        %v669 = vld [vmem:[%s1 + $0x4ec] sm:$0xff]
        %v670 = vld [vmem:[%s1 + $0x4f4] sm:$0xff]
        %v671 = vld [vmem:[%s1 + $0x4fc] sm:$0xf]
        %v864 = vunpack.c.l.b16 %v480
        %v865 = vunpack.c.h.b16 %v480
        %v866 = vunpack.c.l.b16 %v481
        %v867 = vunpack.c.h.b16 %v481
        %v868 = vunpack.c.l.b16 %v482
        %v869 = vunpack.c.l.b16 %v483
        %v870 = vunpack.c.h.b16 %v483
        %v871 = vunpack.c.l.b16 %v484
        %v872 = vunpack.c.h.b16 %v484
        %v873 = vunpack.c.l.b16 %v485
        %v874 = vunpack.c.l.b16 %v486
        %v875 = vunpack.c.h.b16 %v486
        %v876 = vunpack.c.l.b16 %v487
        %v877 = vunpack.c.h.b16 %v487
        %v878 = vunpack.c.l.b16 %v488
        %v879 = vunpack.c.l.b16 %v489
        %v880 = vunpack.c.h.b16 %v489
        %v881 = vunpack.c.l.b16 %v490
        %v882 = vunpack.c.h.b16 %v490
        %v883 = vunpack.c.l.b16 %v491
        %v884 = vunpack.c.l.b16 %v492
        %v885 = vunpack.c.h.b16 %v492
        %v886 = vunpack.c.l.b16 %v493
        %v887 = vunpack.c.h.b16 %v493
        %v888 = vunpack.c.l.b16 %v494
        %v889 = vunpack.c.l.b16 %v495
        %v890 = vunpack.c.h.b16 %v495
        %v891 = vunpack.c.l.b16 %v496
        %v892 = vunpack.c.h.b16 %v496
        %v893 = vunpack.c.l.b16 %v497
        %v894 = vunpack.c.l.b16 %v498
        %v895 = vunpack.c.h.b16 %v498
        %v896 = vunpack.c.l.b16 %v499
        %v897 = vunpack.c.h.b16 %v499
        %v898 = vunpack.c.l.b16 %v500
        %v899 = vunpack.c.l.b16 %v501
        %v900 = vunpack.c.h.b16 %v501
        %v901 = vunpack.c.l.b16 %v502
        %v902 = vunpack.c.h.b16 %v502
        %v903 = vunpack.c.l.b16 %v503
        %v904 = vunpack.c.l.b16 %v504
        %v905 = vunpack.c.h.b16 %v504
        %v906 = vunpack.c.l.b16 %v505
        %v907 = vunpack.c.h.b16 %v505
        %v908 = vunpack.c.l.b16 %v506
        %v909 = vunpack.c.l.b16 %v507
        %v910 = vunpack.c.h.b16 %v507
        %v911 = vunpack.c.l.b16 %v508
        %v912 = vunpack.c.h.b16 %v508
        %v913 = vunpack.c.l.b16 %v509
        %v914 = vunpack.c.l.b16 %v510
        %v915 = vunpack.c.h.b16 %v510
        %v916 = vunpack.c.l.b16 %v511
        %v917 = vunpack.c.h.b16 %v511
        %v918 = vunpack.c.l.b16 %v512
        %v919 = vunpack.c.l.b16 %v513
        %v920 = vunpack.c.h.b16 %v513
        %v921 = vunpack.c.l.b16 %v514
        %v922 = vunpack.c.h.b16 %v514
        %v923 = vunpack.c.l.b16 %v515
        %v924 = vunpack.c.l.b16 %v516
        %v925 = vunpack.c.h.b16 %v516
        %v926 = vunpack.c.l.b16 %v517
        %v927 = vunpack.c.h.b16 %v517
        %v928 = vunpack.c.l.b16 %v518
        %v929 = vunpack.c.l.b16 %v519
        %v930 = vunpack.c.h.b16 %v519
        %v931 = vunpack.c.l.b16 %v520
        %v932 = vunpack.c.h.b16 %v520
        %v933 = vunpack.c.l.b16 %v521
        %v934 = vunpack.c.l.b16 %v522
        %v935 = vunpack.c.h.b16 %v522
        %v936 = vunpack.c.l.b16 %v523
        %v937 = vunpack.c.h.b16 %v523
        %v938 = vunpack.c.l.b16 %v524
        %v939 = vunpack.c.l.b16 %v525
        %v940 = vunpack.c.h.b16 %v525
        %v941 = vunpack.c.l.b16 %v526
        %v942 = vunpack.c.h.b16 %v526
        %v943 = vunpack.c.l.b16 %v527
        %v944 = vunpack.c.l.b16 %v528
        %v945 = vunpack.c.h.b16 %v528
        %v946 = vunpack.c.l.b16 %v529
        %v947 = vunpack.c.h.b16 %v529
        %v948 = vunpack.c.l.b16 %v530
        %v949 = vunpack.c.l.b16 %v531
        %v950 = vunpack.c.h.b16 %v531
        %v951 = vunpack.c.l.b16 %v532
        %v952 = vunpack.c.h.b16 %v532
        %v953 = vunpack.c.l.b16 %v533
        %v954 = vunpack.c.l.b16 %v534
        %v955 = vunpack.c.h.b16 %v534
        %v956 = vunpack.c.l.b16 %v535
        %v957 = vunpack.c.h.b16 %v535
        %v958 = vunpack.c.l.b16 %v536
        %v959 = vunpack.c.l.b16 %v537
        %v960 = vunpack.c.h.b16 %v537
        %v961 = vunpack.c.l.b16 %v538
        %v962 = vunpack.c.h.b16 %v538
        %v963 = vunpack.c.l.b16 %v539
        %v964 = vunpack.c.l.b16 %v540
        %v965 = vunpack.c.h.b16 %v540
        %v966 = vunpack.c.l.b16 %v541
        %v967 = vunpack.c.h.b16 %v541
        %v968 = vunpack.c.l.b16 %v542
        %v969 = vunpack.c.l.b16 %v543
        %v970 = vunpack.c.h.b16 %v543
        %v971 = vunpack.c.l.b16 %v544
        %v972 = vunpack.c.h.b16 %v544
        %v973 = vunpack.c.l.b16 %v545
        %v974 = vunpack.c.l.b16 %v546
        %v975 = vunpack.c.h.b16 %v546
        %v976 = vunpack.c.l.b16 %v547
        %v977 = vunpack.c.h.b16 %v547
        %v978 = vunpack.c.l.b16 %v548
        %v979 = vunpack.c.l.b16 %v549
        %v980 = vunpack.c.h.b16 %v549
        %v981 = vunpack.c.l.b16 %v550
        %v982 = vunpack.c.h.b16 %v550
        %v983 = vunpack.c.l.b16 %v551
        %v984 = vunpack.c.l.b16 %v552
        %v985 = vunpack.c.h.b16 %v552
        %v986 = vunpack.c.l.b16 %v553
        %v987 = vunpack.c.h.b16 %v553
        %v988 = vunpack.c.l.b16 %v554
        %v989 = vunpack.c.l.b16 %v555
        %v990 = vunpack.c.h.b16 %v555
        %v991 = vunpack.c.l.b16 %v556
        %v992 = vunpack.c.h.b16 %v556
        %v993 = vunpack.c.l.b16 %v557
        %v994 = vunpack.c.l.b16 %v558
        %v995 = vunpack.c.h.b16 %v558
        %v996 = vunpack.c.l.b16 %v559
        %v997 = vunpack.c.h.b16 %v559
        %v998 = vunpack.c.l.b16 %v560
        %v999 = vunpack.c.l.b16 %v561
        %v1000 = vunpack.c.h.b16 %v561
        %v1001 = vunpack.c.l.b16 %v562
        %v1002 = vunpack.c.h.b16 %v562
        %v1003 = vunpack.c.l.b16 %v563
        %v1004 = vunpack.c.l.b16 %v564
        %v1005 = vunpack.c.h.b16 %v564
        %v1006 = vunpack.c.l.b16 %v565
        %v1007 = vunpack.c.h.b16 %v565
        %v1008 = vunpack.c.l.b16 %v566
        %v1009 = vunpack.c.l.b16 %v567
        %v1010 = vunpack.c.h.b16 %v567
        %v1011 = vunpack.c.l.b16 %v568
        %v1012 = vunpack.c.h.b16 %v568
        %v1013 = vunpack.c.l.b16 %v569
        %v1014 = vunpack.c.l.b16 %v570
        %v1015 = vunpack.c.h.b16 %v570
        %v1016 = vunpack.c.l.b16 %v571
        %v1017 = vunpack.c.h.b16 %v571
        %v1018 = vunpack.c.l.b16 %v572
        %v1019 = vunpack.c.l.b16 %v573
        %v1020 = vunpack.c.h.b16 %v573
        %v1021 = vunpack.c.l.b16 %v574
        %v1022 = vunpack.c.h.b16 %v574
        %v1023 = vunpack.c.l.b16 %v575
        %v1024 = vunpack.c.l.b16 %v576
        %v1025 = vunpack.c.h.b16 %v576
        %v1026 = vunpack.c.l.b16 %v577
        %v1027 = vunpack.c.h.b16 %v577
        %v1028 = vunpack.c.l.b16 %v578
        %v1029 = vunpack.c.l.b16 %v579
        %v1030 = vunpack.c.h.b16 %v579
        %v1031 = vunpack.c.l.b16 %v580
        %v1032 = vunpack.c.h.b16 %v580
        %v1033 = vunpack.c.l.b16 %v581
        %v1034 = vunpack.c.l.b16 %v582
        %v1035 = vunpack.c.h.b16 %v582
        %v1036 = vunpack.c.l.b16 %v583
        %v1037 = vunpack.c.h.b16 %v583
        %v1038 = vunpack.c.l.b16 %v584
        %v1039 = vunpack.c.l.b16 %v585
        %v1040 = vunpack.c.h.b16 %v585
        %v1041 = vunpack.c.l.b16 %v586
        %v1042 = vunpack.c.h.b16 %v586
        %v1043 = vunpack.c.l.b16 %v587
        %v1044 = vunpack.c.l.b16 %v588
        %v1045 = vunpack.c.h.b16 %v588
        %v1046 = vunpack.c.l.b16 %v589
        %v1047 = vunpack.c.h.b16 %v589
        %v1048 = vunpack.c.l.b16 %v590
        %v1049 = vunpack.c.l.b16 %v591
        %v1050 = vunpack.c.h.b16 %v591
        %v1051 = vunpack.c.l.b16 %v592
        %v1052 = vunpack.c.h.b16 %v592
        %v1053 = vunpack.c.l.b16 %v593
        %v1054 = vunpack.c.l.b16 %v594
        %v1055 = vunpack.c.h.b16 %v594
        %v1056 = vunpack.c.l.b16 %v595
        %v1057 = vunpack.c.h.b16 %v595
        %v1058 = vunpack.c.l.b16 %v596
        %v1059 = vunpack.c.l.b16 %v597
        %v1060 = vunpack.c.h.b16 %v597
        %v1061 = vunpack.c.l.b16 %v598
        %v1062 = vunpack.c.h.b16 %v598
        %v1063 = vunpack.c.l.b16 %v599
        %v1064 = vunpack.c.l.b16 %v600
        %v1065 = vunpack.c.h.b16 %v600
        %v1066 = vunpack.c.l.b16 %v601
        %v1067 = vunpack.c.h.b16 %v601
        %v1068 = vunpack.c.l.b16 %v602
        %v1069 = vunpack.c.l.b16 %v603
        %v1070 = vunpack.c.h.b16 %v603
        %v1071 = vunpack.c.l.b16 %v604
        %v1072 = vunpack.c.h.b16 %v604
        %v1073 = vunpack.c.l.b16 %v605
        %v1074 = vunpack.c.l.b16 %v606
        %v1075 = vunpack.c.h.b16 %v606
        %v1076 = vunpack.c.l.b16 %v607
        %v1077 = vunpack.c.h.b16 %v607
        %v1078 = vunpack.c.l.b16 %v608
        %v1079 = vunpack.c.l.b16 %v609
        %v1080 = vunpack.c.h.b16 %v609
        %v1081 = vunpack.c.l.b16 %v610
        %v1082 = vunpack.c.h.b16 %v610
        %v1083 = vunpack.c.l.b16 %v611
        %v1084 = vunpack.c.l.b16 %v612
        %v1085 = vunpack.c.h.b16 %v612
        %v1086 = vunpack.c.l.b16 %v613
        %v1087 = vunpack.c.h.b16 %v613
        %v1088 = vunpack.c.l.b16 %v614
        %v1089 = vunpack.c.l.b16 %v615
        %v1090 = vunpack.c.h.b16 %v615
        %v1091 = vunpack.c.l.b16 %v616
        %v1092 = vunpack.c.h.b16 %v616
        %v1093 = vunpack.c.l.b16 %v617
        %v1094 = vunpack.c.l.b16 %v618
        %v1095 = vunpack.c.h.b16 %v618
        %v1096 = vunpack.c.l.b16 %v619
        %v1097 = vunpack.c.h.b16 %v619
        %v1098 = vunpack.c.l.b16 %v620
        %v1099 = vunpack.c.l.b16 %v621
        %v1100 = vunpack.c.h.b16 %v621
        %v1101 = vunpack.c.l.b16 %v622
        %v1102 = vunpack.c.h.b16 %v622
        %v1103 = vunpack.c.l.b16 %v623
        %v1104 = vunpack.c.l.b16 %v624
        %v1105 = vunpack.c.h.b16 %v624
        %v1106 = vunpack.c.l.b16 %v625
        %v1107 = vunpack.c.h.b16 %v625
        %v1108 = vunpack.c.l.b16 %v626
        %v1109 = vunpack.c.l.b16 %v627
        %v1110 = vunpack.c.h.b16 %v627
        %v1111 = vunpack.c.l.b16 %v628
        %v1112 = vunpack.c.h.b16 %v628
        %v1113 = vunpack.c.l.b16 %v629
        %v1114 = vunpack.c.l.b16 %v630
        %v1115 = vunpack.c.h.b16 %v630
        %v1116 = vunpack.c.l.b16 %v631
        %v1117 = vunpack.c.h.b16 %v631
        %v1118 = vunpack.c.l.b16 %v632
        %v1119 = vunpack.c.l.b16 %v633
        %v1120 = vunpack.c.h.b16 %v633
        %v1121 = vunpack.c.l.b16 %v634
        %v1122 = vunpack.c.h.b16 %v634
        %v1123 = vunpack.c.l.b16 %v635
        %v1124 = vunpack.c.l.b16 %v636
        %v1125 = vunpack.c.h.b16 %v636
        %v1126 = vunpack.c.l.b16 %v637
        %v1127 = vunpack.c.h.b16 %v637
        %v1128 = vunpack.c.l.b16 %v638
        %v1129 = vunpack.c.l.b16 %v639
        %v1130 = vunpack.c.h.b16 %v639
        %v1131 = vunpack.c.l.b16 %v640
        %v1132 = vunpack.c.h.b16 %v640
        %v1133 = vunpack.c.l.b16 %v641
        %v1134 = vunpack.c.l.b16 %v642
        %v1135 = vunpack.c.h.b16 %v642
        %v1136 = vunpack.c.l.b16 %v643
        %v1137 = vunpack.c.h.b16 %v643
        %v1138 = vunpack.c.l.b16 %v644
        %v1139 = vunpack.c.l.b16 %v645
        %v1140 = vunpack.c.h.b16 %v645
        %v1141 = vunpack.c.l.b16 %v646
        %v1142 = vunpack.c.h.b16 %v646
        %v1143 = vunpack.c.l.b16 %v647
        %v1144 = vunpack.c.l.b16 %v648
        %v1145 = vunpack.c.h.b16 %v648
        %v1146 = vunpack.c.l.b16 %v649
        %v1147 = vunpack.c.h.b16 %v649
        %v1148 = vunpack.c.l.b16 %v650
        %v1149 = vunpack.c.l.b16 %v651
        %v1150 = vunpack.c.h.b16 %v651
        %v1151 = vunpack.c.l.b16 %v652
        %v1152 = vunpack.c.h.b16 %v652
        %v1153 = vunpack.c.l.b16 %v653
        %v1154 = vunpack.c.l.b16 %v654
        %v1155 = vunpack.c.h.b16 %v654
        %v1156 = vunpack.c.l.b16 %v655
        %v1157 = vunpack.c.h.b16 %v655
        %v1158 = vunpack.c.l.b16 %v656
        %v1159 = vunpack.c.l.b16 %v657
        %v1160 = vunpack.c.h.b16 %v657
        %v1161 = vunpack.c.l.b16 %v658
        %v1162 = vunpack.c.h.b16 %v658
        %v1163 = vunpack.c.l.b16 %v659
        %v1164 = vunpack.c.l.b16 %v660
        %v1165 = vunpack.c.h.b16 %v660
        %v1166 = vunpack.c.l.b16 %v661
        %v1167 = vunpack.c.h.b16 %v661
        %v1168 = vunpack.c.l.b16 %v662
        %v1169 = vunpack.c.l.b16 %v663
        %v1170 = vunpack.c.h.b16 %v663
        %v1171 = vunpack.c.l.b16 %v664
        %v1172 = vunpack.c.h.b16 %v664
        %v1173 = vunpack.c.l.b16 %v665
        %v1174 = vunpack.c.l.b16 %v666
        %v1175 = vunpack.c.h.b16 %v666
        %v1176 = vunpack.c.l.b16 %v667
        %v1177 = vunpack.c.h.b16 %v667
        %v1178 = vunpack.c.l.b16 %v668
        %v1179 = vunpack.c.l.b16 %v669
        %v1180 = vunpack.c.h.b16 %v669
        %v1181 = vunpack.c.l.b16 %v670
        %v1182 = vunpack.c.h.b16 %v670
        %v1183 = vunpack.c.l.b16 %v671
        %v1184 = vpack.c.b16 %v869, %v864
        %v1185 = vpack.c.b16 %v870, %v865
        %v1186 = vpack.c.b16 %v871, %v866
        %v1187 = vpack.c.b16 %v872, %v867
        %v1188 = vpack.c.b16 %v873, %v868
        %v1189 = vpack.c.b16 %v879, %v874
        %v1190 = vpack.c.b16 %v880, %v875
        %v1191 = vpack.c.b16 %v881, %v876
        %v1192 = vpack.c.b16 %v882, %v877
        %v1193 = vpack.c.b16 %v883, %v878
        %v1194 = vpack.c.b16 %v889, %v884
        %v1195 = vpack.c.b16 %v890, %v885
        %v1196 = vpack.c.b16 %v891, %v886
        %v1197 = vpack.c.b16 %v892, %v887
        %v1198 = vpack.c.b16 %v893, %v888
        %v1199 = vpack.c.b16 %v899, %v894
        %v1200 = vpack.c.b16 %v900, %v895
        %v1201 = vpack.c.b16 %v901, %v896
        %v1202 = vpack.c.b16 %v902, %v897
        %v1203 = vpack.c.b16 %v903, %v898
        %v1204 = vpack.c.b16 %v909, %v904
        %v1205 = vpack.c.b16 %v910, %v905
        %v1206 = vpack.c.b16 %v911, %v906
        %v1207 = vpack.c.b16 %v912, %v907
        %v1208 = vpack.c.b16 %v913, %v908
        %v1209 = vpack.c.b16 %v919, %v914
        %v1210 = vpack.c.b16 %v920, %v915
        %v1211 = vpack.c.b16 %v921, %v916
        %v1212 = vpack.c.b16 %v922, %v917
        %v1213 = vpack.c.b16 %v923, %v918
        %v1214 = vpack.c.b16 %v929, %v924
        %v1215 = vpack.c.b16 %v930, %v925
        %v1216 = vpack.c.b16 %v931, %v926
        %v1217 = vpack.c.b16 %v932, %v927
        %v1218 = vpack.c.b16 %v933, %v928
        %v1219 = vpack.c.b16 %v939, %v934
        %v1220 = vpack.c.b16 %v940, %v935
        %v1221 = vpack.c.b16 %v941, %v936
        %v1222 = vpack.c.b16 %v942, %v937
        %v1223 = vpack.c.b16 %v943, %v938
        %v1224 = vpack.c.b16 %v949, %v944
        %v1225 = vpack.c.b16 %v950, %v945
        %v1226 = vpack.c.b16 %v951, %v946
        %v1227 = vpack.c.b16 %v952, %v947
        %v1228 = vpack.c.b16 %v953, %v948
        %v1229 = vpack.c.b16 %v959, %v954
        %v1230 = vpack.c.b16 %v960, %v955
        %v1231 = vpack.c.b16 %v961, %v956
        %v1232 = vpack.c.b16 %v962, %v957
        %v1233 = vpack.c.b16 %v963, %v958
        %v1234 = vpack.c.b16 %v969, %v964
        %v1235 = vpack.c.b16 %v970, %v965
        %v1236 = vpack.c.b16 %v971, %v966
        %v1237 = vpack.c.b16 %v972, %v967
        %v1238 = vpack.c.b16 %v973, %v968
        %v1239 = vpack.c.b16 %v979, %v974
        %v1240 = vpack.c.b16 %v980, %v975
        %v1241 = vpack.c.b16 %v981, %v976
        %v1242 = vpack.c.b16 %v982, %v977
        %v1243 = vpack.c.b16 %v983, %v978
        %v1244 = vpack.c.b16 %v989, %v984
        %v1245 = vpack.c.b16 %v990, %v985
        %v1246 = vpack.c.b16 %v991, %v986
        %v1247 = vpack.c.b16 %v992, %v987
        %v1248 = vpack.c.b16 %v993, %v988
        %v1249 = vpack.c.b16 %v999, %v994
        %v1250 = vpack.c.b16 %v1000, %v995
        %v1251 = vpack.c.b16 %v1001, %v996
        %v1252 = vpack.c.b16 %v1002, %v997
        %v1253 = vpack.c.b16 %v1003, %v998
        %v1254 = vpack.c.b16 %v1009, %v1004
        %v1255 = vpack.c.b16 %v1010, %v1005
        %v1256 = vpack.c.b16 %v1011, %v1006
        %v1257 = vpack.c.b16 %v1012, %v1007
        %v1258 = vpack.c.b16 %v1013, %v1008
        %v1259 = vpack.c.b16 %v1019, %v1014
        %v1260 = vpack.c.b16 %v1020, %v1015
        %v1261 = vpack.c.b16 %v1021, %v1016
        %v1262 = vpack.c.b16 %v1022, %v1017
        %v1263 = vpack.c.b16 %v1023, %v1018
        %v1264 = vpack.c.b16 %v1029, %v1024
        %v1265 = vpack.c.b16 %v1030, %v1025
        %v1266 = vpack.c.b16 %v1031, %v1026
        %v1267 = vpack.c.b16 %v1032, %v1027
        %v1268 = vpack.c.b16 %v1033, %v1028
        %v1269 = vpack.c.b16 %v1039, %v1034
        %v1270 = vpack.c.b16 %v1040, %v1035
        %v1271 = vpack.c.b16 %v1041, %v1036
        %v1272 = vpack.c.b16 %v1042, %v1037
        %v1273 = vpack.c.b16 %v1043, %v1038
        %v1274 = vpack.c.b16 %v1049, %v1044
        %v1275 = vpack.c.b16 %v1050, %v1045
        %v1276 = vpack.c.b16 %v1051, %v1046
        %v1277 = vpack.c.b16 %v1052, %v1047
        %v1278 = vpack.c.b16 %v1053, %v1048
        %v1279 = vpack.c.b16 %v1059, %v1054
        %v1280 = vpack.c.b16 %v1060, %v1055
        %v1281 = vpack.c.b16 %v1061, %v1056
        %v1282 = vpack.c.b16 %v1062, %v1057
        %v1283 = vpack.c.b16 %v1063, %v1058
        %v1284 = vpack.c.b16 %v1069, %v1064
        %v1285 = vpack.c.b16 %v1070, %v1065
        %v1286 = vpack.c.b16 %v1071, %v1066
        %v1287 = vpack.c.b16 %v1072, %v1067
        %v1288 = vpack.c.b16 %v1073, %v1068
        %v1289 = vpack.c.b16 %v1079, %v1074
        %v1290 = vpack.c.b16 %v1080, %v1075
        %v1291 = vpack.c.b16 %v1081, %v1076
        %v1292 = vpack.c.b16 %v1082, %v1077
        %v1293 = vpack.c.b16 %v1083, %v1078
        %v1294 = vpack.c.b16 %v1089, %v1084
        %v1295 = vpack.c.b16 %v1090, %v1085
        %v1296 = vpack.c.b16 %v1091, %v1086
        %v1297 = vpack.c.b16 %v1092, %v1087
        %v1298 = vpack.c.b16 %v1093, %v1088
        %v1299 = vpack.c.b16 %v1099, %v1094
        %v1300 = vpack.c.b16 %v1100, %v1095
        %v1301 = vpack.c.b16 %v1101, %v1096
        %v1302 = vpack.c.b16 %v1102, %v1097
        %v1303 = vpack.c.b16 %v1103, %v1098
        %v1304 = vpack.c.b16 %v1109, %v1104
        %v1305 = vpack.c.b16 %v1110, %v1105
        %v1306 = vpack.c.b16 %v1111, %v1106
        %v1307 = vpack.c.b16 %v1112, %v1107
        %v1308 = vpack.c.b16 %v1113, %v1108
        %v1309 = vpack.c.b16 %v1119, %v1114
        %v1310 = vpack.c.b16 %v1120, %v1115
        %v1311 = vpack.c.b16 %v1121, %v1116
        %v1312 = vpack.c.b16 %v1122, %v1117
        %v1313 = vpack.c.b16 %v1123, %v1118
        %v1314 = vpack.c.b16 %v1129, %v1124
        %v1315 = vpack.c.b16 %v1130, %v1125
        %v1316 = vpack.c.b16 %v1131, %v1126
        %v1317 = vpack.c.b16 %v1132, %v1127
        %v1318 = vpack.c.b16 %v1133, %v1128
        %v1319 = vpack.c.b16 %v1139, %v1134
        %v1320 = vpack.c.b16 %v1140, %v1135
        %v1321 = vpack.c.b16 %v1141, %v1136
        %v1322 = vpack.c.b16 %v1142, %v1137
        %v1323 = vpack.c.b16 %v1143, %v1138
        %v1324 = vpack.c.b16 %v1149, %v1144
        %v1325 = vpack.c.b16 %v1150, %v1145
        %v1326 = vpack.c.b16 %v1151, %v1146
        %v1327 = vpack.c.b16 %v1152, %v1147
        %v1328 = vpack.c.b16 %v1153, %v1148
        %v1329 = vpack.c.b16 %v1159, %v1154
        %v1330 = vpack.c.b16 %v1160, %v1155
        %v1331 = vpack.c.b16 %v1161, %v1156
        %v1332 = vpack.c.b16 %v1162, %v1157
        %v1333 = vpack.c.b16 %v1163, %v1158
        %v1334 = vpack.c.b16 %v1169, %v1164
        %v1335 = vpack.c.b16 %v1170, %v1165
        %v1336 = vpack.c.b16 %v1171, %v1166
        %v1337 = vpack.c.b16 %v1172, %v1167
        %v1338 = vpack.c.b16 %v1173, %v1168
        %v1339 = vpack.c.b16 %v1179, %v1174
        %v1340 = vpack.c.b16 %v1180, %v1175
        %v1341 = vpack.c.b16 %v1181, %v1176
        %v1342 = vpack.c.b16 %v1182, %v1177
        %v1343 = vpack.c.b16 %v1183, %v1178
        %1504 = vmatprep.subr.bf16.mxu0 %v1220
        %1505 = vmatpush1.bf16.msra.mxu0 %v1219
        %1506 = vmatprep.subr.bf16.mxu0 %v1215
        %1507 = vmatpush1.bf16.msra.mxu0 %v1214
        %1508 = vmatprep.subr.bf16.mxu0 %v1210
        %1509 = vmatpush1.bf16.msra.mxu0 %v1209
        %1510 = vmatprep.subr.bf16.mxu0 %v1205
        %1511 = vmatpush1.bf16.msra.mxu0 %v1204
        %1512 = vmatprep.subr.bf16.mxu0 %v1200
        %1513 = vmatpush1.bf16.msra.mxu0 %v1199
        %1514 = vmatprep.subr.bf16.mxu0 %v1195
        %1515 = vmatpush1.bf16.msra.mxu0 %v1194
        %1516 = vmatprep.subr.bf16.mxu0 %v1190
        %1517 = vmatpush1.bf16.msra.mxu0 %v1189
        %1518 = vmatprep.subr.bf16.mxu0 %v1185
        %1519 = vmatpush1.bf16.msra.mxu0 %v1184
        %1520 = vmatprep.subr.bf16.mxu0 %v1260
        %1521 = vmatpush2.bf16.msra.mxu0 %v1259
        %1522 = vmatprep.subr.bf16.mxu0 %v1255
        %1523 = vmatpush2.bf16.msra.mxu0 %v1254
        %1524 = vmatprep.subr.bf16.mxu0 %v1250
        %1525 = vmatpush2.bf16.msra.mxu0 %v1249
        %1526 = vmatprep.subr.bf16.mxu0 %v1245
        %1527 = vmatpush2.bf16.msra.mxu0 %v1244
        %1528 = vmatprep.subr.bf16.mxu0 %v1240
        %1529 = vmatpush2.bf16.msra.mxu0 %v1239
        %1530 = vmatprep.subr.bf16.mxu0 %v1235
        %1531 = vmatpush2.bf16.msra.mxu0 %v1234
        %1532 = vmatprep.subr.bf16.mxu0 %v1230
        %1533 = vmatpush2.bf16.msra.mxu0 %v1229
        %1534 = vmatprep.subr.bf16.mxu0 %v1225
        %1535 = vmatpush2.bf16.msra.mxu0 %v1224
        %1536 = vmatprep.mubr.bf16.mxu0 %v473
        %1537 = vmatmul.mubr.bf16.gmra.mxu0 %v472
        %v1538 = vpop.f32.mrf.mxu0
        %v1539 = vadd.f32 0.0, %v1538
        %v1540 = vpop.f32.mrf.mxu0
        %v1541 = vadd.f32 0.0, %v1540
        %v1542 = vpop.f32.mrf.mxu0
        %v1543 = vadd.f32 0.0, %v1542
        %v1544 = vpop.f32.mrf.mxu0
        %v1545 = vadd.f32 0.0, %v1544
        %1546 = vmatprep.mubr.bf16.mxu0 %v477
        %1547 = vmatmul.mubr.bf16.gmra.mxu0 %v476
        %v1548 = vpop.f32.mrf.mxu0
        %v1549 = vadd.f32 0.0, %v1548
        %v1550 = vpop.f32.mrf.mxu0
        %v1551 = vadd.f32 0.0, %v1550
        %v1552 = vpop.f32.mrf.mxu0
        %v1553 = vpop.f32.mrf.mxu0
        %1554 = vdwg.mxu0
        %1555 = vmatprep.subr.bf16.mxu0 %v1300
        %1556 = vmatpush1.bf16.msra.mxu0 %v1299
        %1557 = vmatprep.subr.bf16.mxu0 %v1295
        %1558 = vmatpush1.bf16.msra.mxu0 %v1294
        %1559 = vmatprep.subr.bf16.mxu0 %v1290
        %1560 = vmatpush1.bf16.msra.mxu0 %v1289
        %1561 = vmatprep.subr.bf16.mxu0 %v1285
        %1562 = vmatpush1.bf16.msra.mxu0 %v1284
        %1563 = vmatprep.subr.bf16.mxu0 %v1280
        %1564 = vmatpush1.bf16.msra.mxu0 %v1279
        %1565 = vmatprep.subr.bf16.mxu0 %v1275
        %1566 = vmatpush1.bf16.msra.mxu0 %v1274
        %1567 = vmatprep.subr.bf16.mxu0 %v1270
        %1568 = vmatpush1.bf16.msra.mxu0 %v1269
        %1569 = vmatprep.subr.bf16.mxu0 %v1265
        %1570 = vmatpush1.bf16.msra.mxu0 %v1264
        %1571 = vmatprep.subr.bf16.mxu0 %v1340
        %1572 = vmatpush2.bf16.msra.mxu0 %v1339
        %1573 = vmatprep.subr.bf16.mxu0 %v1335
        %1574 = vmatpush2.bf16.msra.mxu0 %v1334
        %1575 = vmatprep.subr.bf16.mxu0 %v1330
        %1576 = vmatpush2.bf16.msra.mxu0 %v1329
        %1577 = vmatprep.subr.bf16.mxu0 %v1325
        %1578 = vmatpush2.bf16.msra.mxu0 %v1324
        %1579 = vmatprep.subr.bf16.mxu0 %v1320
        %1580 = vmatpush2.bf16.msra.mxu0 %v1319
        %1581 = vmatprep.subr.bf16.mxu0 %v1315
        %1582 = vmatpush2.bf16.msra.mxu0 %v1314
        %1583 = vmatprep.subr.bf16.mxu0 %v1310
        %1584 = vmatpush2.bf16.msra.mxu0 %v1309
        %1585 = vmatprep.subr.bf16.mxu0 %v1305
        %1586 = vmatpush2.bf16.msra.mxu0 %v1304
        %1587 = vmatprep.mubr.bf16.mxu0 %v475
        %1588 = vmatmul.mubr.bf16.gmra.mxu0 %v474
        %v1589 = vpop.f32.mrf.mxu0
        %v1590 = vadd.f32 %v1539, %v1589
        %v1591 = vpop.f32.mrf.mxu0
        %v1592 = vadd.f32 %v1541, %v1591
        %v1593 = vpop.f32.mrf.mxu0
        %v1594 = vadd.f32 %v1543, %v1593
        %v1595 = vpop.f32.mrf.mxu0
        %v1596 = vadd.f32 %v1545, %v1595
        %1597 = vmatprep.mubr.bf16.mxu0 %v479
        %1598 = vmatmul.mubr.bf16.gmra.mxu0 %v478
        %v1599 = vpop.f32.mrf.mxu0
        %v1600 = vadd.f32 %v1549, %v1599
        %v1601 = vpop.f32.mrf.mxu0
        %v1602 = vadd.f32 %v1551, %v1601
        %v1603 = vpop.f32.mrf.mxu0
        %v1604 = vpop.f32.mrf.mxu0
        %1605 = vdwg.mxu0
        %1606 = vmatprep.subr.bf16.mxu0 %v1222
        %1607 = vmatpush1.bf16.msra.mxu0 %v1221
        %1608 = vmatprep.subr.bf16.mxu0 %v1217
        %1609 = vmatpush1.bf16.msra.mxu0 %v1216
        %1610 = vmatprep.subr.bf16.mxu0 %v1212
        %1611 = vmatpush1.bf16.msra.mxu0 %v1211
        %1612 = vmatprep.subr.bf16.mxu0 %v1207
        %1613 = vmatpush1.bf16.msra.mxu0 %v1206
        %1614 = vmatprep.subr.bf16.mxu0 %v1202
        %1615 = vmatpush1.bf16.msra.mxu0 %v1201
        %1616 = vmatprep.subr.bf16.mxu0 %v1197
        %1617 = vmatpush1.bf16.msra.mxu0 %v1196
        %1618 = vmatprep.subr.bf16.mxu0 %v1192
        %1619 = vmatpush1.bf16.msra.mxu0 %v1191
        %1620 = vmatprep.subr.bf16.mxu0 %v1187
        %1621 = vmatpush1.bf16.msra.mxu0 %v1186
        %1622 = vmatprep.subr.bf16.mxu0 %v1262
        %1623 = vmatpush2.bf16.msra.mxu0 %v1261
        %1624 = vmatprep.subr.bf16.mxu0 %v1257
        %1625 = vmatpush2.bf16.msra.mxu0 %v1256
        %1626 = vmatprep.subr.bf16.mxu0 %v1252
        %1627 = vmatpush2.bf16.msra.mxu0 %v1251
        %1628 = vmatprep.subr.bf16.mxu0 %v1247
        %1629 = vmatpush2.bf16.msra.mxu0 %v1246
        %1630 = vmatprep.subr.bf16.mxu0 %v1242
        %1631 = vmatpush2.bf16.msra.mxu0 %v1241
        %1632 = vmatprep.subr.bf16.mxu0 %v1237
        %1633 = vmatpush2.bf16.msra.mxu0 %v1236
        %1634 = vmatprep.subr.bf16.mxu0 %v1232
        %1635 = vmatpush2.bf16.msra.mxu0 %v1231
        %1636 = vmatprep.subr.bf16.mxu0 %v1227
        %1637 = vmatpush2.bf16.msra.mxu0 %v1226
        %1638 = vmatprep.mubr.bf16.mxu0 %v473
        %1639 = vmatmul.mubr.bf16.gmra.mxu0 %v472
        %v1640 = vpop.f32.mrf.mxu0
        %v1641 = vadd.f32 0.0, %v1640
        %v1642 = vpop.f32.mrf.mxu0
        %v1643 = vadd.f32 0.0, %v1642
        %v1644 = vpop.f32.mrf.mxu0
        %v1645 = vadd.f32 0.0, %v1644
        %v1646 = vpop.f32.mrf.mxu0
        %v1647 = vadd.f32 0.0, %v1646
        %1648 = vmatprep.mubr.bf16.mxu0 %v477
        %1649 = vmatmul.mubr.bf16.gmra.mxu0 %v476
        %v1650 = vpop.f32.mrf.mxu0
        %v1651 = vadd.f32 0.0, %v1650
        %v1652 = vpop.f32.mrf.mxu0
        %v1653 = vadd.f32 0.0, %v1652
        %v1654 = vpop.f32.mrf.mxu0
        %v1655 = vpop.f32.mrf.mxu0
        %1656 = vdwg.mxu0
        %1657 = vmatprep.subr.bf16.mxu0 %v1302
        %1658 = vmatpush1.bf16.msra.mxu0 %v1301
        %1659 = vmatprep.subr.bf16.mxu0 %v1297
        %1660 = vmatpush1.bf16.msra.mxu0 %v1296
        %1661 = vmatprep.subr.bf16.mxu0 %v1292
        %1662 = vmatpush1.bf16.msra.mxu0 %v1291
        %1663 = vmatprep.subr.bf16.mxu0 %v1287
        %1664 = vmatpush1.bf16.msra.mxu0 %v1286
        %1665 = vmatprep.subr.bf16.mxu0 %v1282
        %1666 = vmatpush1.bf16.msra.mxu0 %v1281
        %1667 = vmatprep.subr.bf16.mxu0 %v1277
        %1668 = vmatpush1.bf16.msra.mxu0 %v1276
        %1669 = vmatprep.subr.bf16.mxu0 %v1272
        %1670 = vmatpush1.bf16.msra.mxu0 %v1271
        %1671 = vmatprep.subr.bf16.mxu0 %v1267
        %1672 = vmatpush1.bf16.msra.mxu0 %v1266
        %1673 = vmatprep.subr.bf16.mxu0 %v1342
        %1674 = vmatpush2.bf16.msra.mxu0 %v1341
        %1675 = vmatprep.subr.bf16.mxu0 %v1337
        %1676 = vmatpush2.bf16.msra.mxu0 %v1336
        %1677 = vmatprep.subr.bf16.mxu0 %v1332
        %1678 = vmatpush2.bf16.msra.mxu0 %v1331
        %1679 = vmatprep.subr.bf16.mxu0 %v1327
        %1680 = vmatpush2.bf16.msra.mxu0 %v1326
        %1681 = vmatprep.subr.bf16.mxu0 %v1322
        %1682 = vmatpush2.bf16.msra.mxu0 %v1321
        %1683 = vmatprep.subr.bf16.mxu0 %v1317
        %1684 = vmatpush2.bf16.msra.mxu0 %v1316
        %1685 = vmatprep.subr.bf16.mxu0 %v1312
        %1686 = vmatpush2.bf16.msra.mxu0 %v1311
        %1687 = vmatprep.subr.bf16.mxu0 %v1307
        %1688 = vmatpush2.bf16.msra.mxu0 %v1306
        %1689 = vmatprep.mubr.bf16.mxu0 %v475
        %1690 = vmatmul.mubr.bf16.gmra.mxu0 %v474
        %v1691 = vpop.f32.mrf.mxu0
        %v1692 = vadd.f32 %v1641, %v1691
        %v1693 = vpop.f32.mrf.mxu0
        %v1694 = vadd.f32 %v1643, %v1693
        %v1695 = vpop.f32.mrf.mxu0
        %v1696 = vadd.f32 %v1645, %v1695
        %v1697 = vpop.f32.mrf.mxu0
        %v1698 = vadd.f32 %v1647, %v1697
        %1699 = vmatprep.mubr.bf16.mxu0 %v479
        %1700 = vmatmul.mubr.bf16.gmra.mxu0 %v478
        %v1701 = vpop.f32.mrf.mxu0
        %v1702 = vadd.f32 %v1651, %v1701
        %v1703 = vpop.f32.mrf.mxu0
        %v1704 = vadd.f32 %v1653, %v1703
        %v1705 = vpop.f32.mrf.mxu0
        %v1706 = vpop.f32.mrf.mxu0
        %1707 = vdwg.mxu0
        %1708 = vmatprep.subr.bf16.mxu0 0
        %1709 = vmatpush1.bf16.msra.mxu0 %v1223
        %1710 = vmatprep.subr.bf16.mxu0 0
        %1711 = vmatpush1.bf16.msra.mxu0 %v1218
        %1712 = vmatprep.subr.bf16.mxu0 0
        %1713 = vmatpush1.bf16.msra.mxu0 %v1213
        %1714 = vmatprep.subr.bf16.mxu0 0
        %1715 = vmatpush1.bf16.msra.mxu0 %v1208
        %1716 = vmatprep.subr.bf16.mxu0 0
        %1717 = vmatpush1.bf16.msra.mxu0 %v1203
        %1718 = vmatprep.subr.bf16.mxu0 0
        %1719 = vmatpush1.bf16.msra.mxu0 %v1198
        %1720 = vmatprep.subr.bf16.mxu0 0
        %1721 = vmatpush1.bf16.msra.mxu0 %v1193
        %1722 = vmatprep.subr.bf16.mxu0 0
        %1723 = vmatpush1.bf16.msra.mxu0 %v1188
        %1724 = vmatprep.subr.bf16.mxu0 0
        %1725 = vmatpush2.bf16.msra.mxu0 %v1263
        %1726 = vmatprep.subr.bf16.mxu0 0
        %1727 = vmatpush2.bf16.msra.mxu0 %v1258
        %1728 = vmatprep.subr.bf16.mxu0 0
        %1729 = vmatpush2.bf16.msra.mxu0 %v1253
        %1730 = vmatprep.subr.bf16.mxu0 0
        %1731 = vmatpush2.bf16.msra.mxu0 %v1248
        %1732 = vmatprep.subr.bf16.mxu0 0
        %1733 = vmatpush2.bf16.msra.mxu0 %v1243
        %1734 = vmatprep.subr.bf16.mxu0 0
        %1735 = vmatpush2.bf16.msra.mxu0 %v1238
        %1736 = vmatprep.subr.bf16.mxu0 0
        %1737 = vmatpush2.bf16.msra.mxu0 %v1233
        %1738 = vmatprep.subr.bf16.mxu0 0
        %1739 = vmatpush2.bf16.msra.mxu0 %v1228
        %1740 = vmatprep.mubr.bf16.mxu0 %v473
        %1741 = vmatmul.mubr.bf16.gmra.mxu0 %v472
        %v1742 = vpop.f32.mrf.mxu0
        %v1743 = vadd.f32 0.0, %v1742
        %v1744 = vpop.f32.mrf.mxu0
        %v1745 = vpop.f32.mrf.mxu0
        %v1746 = vadd.f32 0.0, %v1745
        %v1747 = vpop.f32.mrf.mxu0
        %1748 = vmatprep.mubr.bf16.mxu0 %v477
        %1749 = vmatmul.mubr.bf16.gmra.mxu0 %v476
        %v1750 = vpop.f32.mrf.mxu0
        %v1751 = vadd.f32 0.0, %v1750
        %v1752 = vpop.f32.mrf.mxu0
        %v1753 = vpop.f32.mrf.mxu0
        %v1754 = vpop.f32.mrf.mxu0
        %1755 = vdwg.mxu0
        %1756 = vmatprep.subr.bf16.mxu0 0
        %1757 = vmatpush1.bf16.msra.mxu0 %v1303
        %1758 = vmatprep.subr.bf16.mxu0 0
        %1759 = vmatpush1.bf16.msra.mxu0 %v1298
        %1760 = vmatprep.subr.bf16.mxu0 0
        %1761 = vmatpush1.bf16.msra.mxu0 %v1293
        %1762 = vmatprep.subr.bf16.mxu0 0
        %1763 = vmatpush1.bf16.msra.mxu0 %v1288
        %1764 = vmatprep.subr.bf16.mxu0 0
        %1765 = vmatpush1.bf16.msra.mxu0 %v1283
        %1766 = vmatprep.subr.bf16.mxu0 0
        %1767 = vmatpush1.bf16.msra.mxu0 %v1278
        %1768 = vmatprep.subr.bf16.mxu0 0
        %1769 = vmatpush1.bf16.msra.mxu0 %v1273
        %1770 = vmatprep.subr.bf16.mxu0 0
        %1771 = vmatpush1.bf16.msra.mxu0 %v1268
        %1772 = vmatprep.subr.bf16.mxu0 0
        %1773 = vmatpush2.bf16.msra.mxu0 %v1343
        %1774 = vmatprep.subr.bf16.mxu0 0
        %1775 = vmatpush2.bf16.msra.mxu0 %v1338
        %1776 = vmatprep.subr.bf16.mxu0 0
        %1777 = vmatpush2.bf16.msra.mxu0 %v1333
        %1778 = vmatprep.subr.bf16.mxu0 0
        %1779 = vmatpush2.bf16.msra.mxu0 %v1328
        %1780 = vmatprep.subr.bf16.mxu0 0
        %1781 = vmatpush2.bf16.msra.mxu0 %v1323
        %1782 = vmatprep.subr.bf16.mxu0 0
        %1783 = vmatpush2.bf16.msra.mxu0 %v1318
        %1784 = vmatprep.subr.bf16.mxu0 0
        %1785 = vmatpush2.bf16.msra.mxu0 %v1313
        %1786 = vmatprep.subr.bf16.mxu0 0
        %1787 = vmatpush2.bf16.msra.mxu0 %v1308
        %1788 = vmatprep.mubr.bf16.mxu0 %v475
        %1789 = vmatmul.mubr.bf16.gmra.mxu0 %v474
        %v1790 = vpop.f32.mrf.mxu0
        %v1791 = vadd.f32 %v1743, %v1790
        %v1792 = vpop.f32.mrf.mxu0
        %v1793 = vpop.f32.mrf.mxu0
        %v1794 = vadd.f32 %v1746, %v1793
        %v1795 = vpop.f32.mrf.mxu0
        %1796 = vmatprep.mubr.bf16.mxu0 %v479
        %1797 = vmatmul.mubr.bf16.gmra.mxu0 %v478
        %v1798 = vpop.f32.mrf.mxu0
        %v1799 = vadd.f32 %v1751, %v1798
        %v1800 = vpop.f32.mrf.mxu0
        %v1801 = vpop.f32.mrf.mxu0
        %v1802 = vpop.f32.mrf.mxu0
        %1803 = vdwg.mxu0
        %v1804 = vmul.f32 %v1590, %v1590
        %v1805 = vmul.f32 %v1592, %v1592
        %v1806 = vmul.f32 %v1692, %v1692
        %v1807 = vmul.f32 %v1694, %v1694
        %v1808 = vmul.f32 %v1791, %v1791
        %v1809 = vmul.f32 %v1594, %v1594
        %v1810 = vmul.f32 %v1596, %v1596
        %v1811 = vmul.f32 %v1696, %v1696
        %v1812 = vmul.f32 %v1698, %v1698
        %v1813 = vmul.f32 %v1794, %v1794
        %v1814 = vmul.f32 %v1600, %v1600
        %v1815 = vmul.f32 %v1602, %v1602
        %v1816 = vmul.f32 %v1702, %v1702
        %v1817 = vmul.f32 %v1704, %v1704
        %v1818 = vmul.f32 %v1799, %v1799
        %v1819 = vpack.c.bf16 %v1809, %v1804
        %v1820 = vpack.c.bf16 %v1810, %v1805
        %v1821 = vpack.c.bf16 %v1811, %v1806
        %v1822 = vpack.c.bf16 %v1812, %v1807
        %v1823 = vpack.c.bf16 %v1813, %v1808
        %v1824 = vpack.c.bf16 %v1814, %v1814
        %v1825 = vpack.c.bf16 %v1815, %v1815
        %v1826 = vpack.c.bf16 %v1816, %v1816
        %v1827 = vpack.c.bf16 %v1817, %v1817
        %v1828 = vpack.c.bf16 %v1818, %v1818
        %v1829 = vld [vmem:[%s2] sm:$0xf]
        %v1830 = vld [vmem:[%s2 + $0x4] sm:$0xf]
        %v1831 = vld [vmem:[%s2 + $0x8] sm:$0xf]
        %v1832 = vld [vmem:[%s2 + $0xc] sm:$0xf]
        %v1833 = vld [vmem:[%s2 + $0x10] sm:$0xf]
        %v1834 = vld [vmem:[%s2 + $0x14] sm:$0xf]
        %v1835 = vld [vmem:[%s2 + $0x18] sm:$0xf]
        %v1836 = vld [vmem:[%s2 + $0x1c] sm:$0xf]
        %v1837 = vld [vmem:[%s2 + $0x20] sm:$0xf]
        %v1838 = vld [vmem:[%s2 + $0x24] sm:$0xf]
        %v1839 = vld [vmem:[%s2 + $0x28] sm:$0xf]
        %v1840 = vld [vmem:[%s2 + $0x2c] sm:$0xf]
        %v1841 = vld [vmem:[%s2 + $0x30] sm:$0xf]
        %v1842 = vld [vmem:[%s2 + $0x34] sm:$0xf]
        %v1843 = vld [vmem:[%s2 + $0x38] sm:$0xf]
        %v1844 = vld [vmem:[%s2 + $0x3c] sm:$0xf]
        %v1845 = vld [vmem:[%s2 + $0x40] sm:$0xf]
        %v1846 = vld [vmem:[%s2 + $0x44] sm:$0xf]
        %v1847 = vld [vmem:[%s2 + $0x48] sm:$0xf]
        %v1848 = vld [vmem:[%s2 + $0x4c] sm:$0xf]
        %v1849 = vld [vmem:[%s2 + $0x50] sm:$0xf]
        %v1850 = vld [vmem:[%s2 + $0x54] sm:$0xf]
        %v1851 = vld [vmem:[%s2 + $0x58] sm:$0xf]
        %v1852 = vld [vmem:[%s2 + $0x5c] sm:$0xf]
        %v1853 = vld [vmem:[%s2 + $0x60] sm:$0xf]
        %v1854 = vld [vmem:[%s2 + $0x64] sm:$0xf]
        %v1855 = vld [vmem:[%s2 + $0x68] sm:$0xf]
        %v1856 = vld [vmem:[%s2 + $0x6c] sm:$0xf]
        %v1857 = vld [vmem:[%s2 + $0x70] sm:$0xf]
        %v1858 = vld [vmem:[%s2 + $0x74] sm:$0xf]
        %v1859 = vld [vmem:[%s2 + $0x78] sm:$0xf]
        %v1860 = vld [vmem:[%s2 + $0x7c] sm:$0xf]
        %v1861 = vld [vmem:[%s2 + $0x80] sm:$0xf]
        %v1862 = vld [vmem:[%s2 + $0x84] sm:$0xf]
        %v1863 = vld [vmem:[%s2 + $0x88] sm:$0xf]
        %v1864 = vld [vmem:[%s2 + $0x8c] sm:$0xf]
        %v1865 = vld [vmem:[%s2 + $0x90] sm:$0xf]
        %v1866 = vld [vmem:[%s2 + $0x94] sm:$0xf]
        %v1867 = vld [vmem:[%s2 + $0x98] sm:$0xf]
        %v1868 = vld [vmem:[%s2 + $0x9c] sm:$0xf]
        %v1869 = vld [vmem:[%s2 + $0xa0] sm:$0xf]
        %v1870 = vld [vmem:[%s2 + $0xa4] sm:$0xf]
        %v1871 = vld [vmem:[%s2 + $0xa8] sm:$0xf]
        %v1872 = vld [vmem:[%s2 + $0xac] sm:$0xf]
        %v1873 = vld [vmem:[%s2 + $0xb0] sm:$0xf]
        %v1874 = vld [vmem:[%s2 + $0xb4] sm:$0xf]
        %v1875 = vld [vmem:[%s2 + $0xb8] sm:$0xf]
        %v1876 = vld [vmem:[%s2 + $0xbc] sm:$0xf]
        %v1877 = vld [vmem:[%s2 + $0xc0] sm:$0xf]
        %v1878 = vld [vmem:[%s2 + $0xc4] sm:$0xf]
        %v1879 = vld [vmem:[%s2 + $0xc8] sm:$0xf]
        %v1880 = vld [vmem:[%s2 + $0xcc] sm:$0xf]
        %v1881 = vld [vmem:[%s2 + $0xd0] sm:$0xf]
        %v1882 = vld [vmem:[%s2 + $0xd4] sm:$0xf]
        %v1883 = vld [vmem:[%s2 + $0xd8] sm:$0xf]
        %v1884 = vld [vmem:[%s2 + $0xdc] sm:$0xf]
        %v1885 = vld [vmem:[%s2 + $0xe0] sm:$0xf]
        %v1886 = vld [vmem:[%s2 + $0xe4] sm:$0xf]
        %v1887 = vld [vmem:[%s2 + $0xe8] sm:$0xf]
        %v1888 = vld [vmem:[%s2 + $0xec] sm:$0xf]
        %v1889 = vld [vmem:[%s2 + $0xf0] sm:$0xf]
        %v1890 = vld [vmem:[%s2 + $0xf4] sm:$0xf]
        %v1891 = vld [vmem:[%s2 + $0xf8] sm:$0xf]
        %v1892 = vld [vmem:[%s2 + $0xfc] sm:$0xf]
        %v1893 = vld [vmem:[%s2 + $0x100] sm:$0x1]
        %v1959 = vunpack.c.l.b16 %v1829
        %v1960 = vunpack.c.l.b16 %v1830
        %v1961 = vunpack.c.l.b16 %v1831
        %v1962 = vunpack.c.l.b16 %v1832
        %v1963 = vunpack.c.l.b16 %v1833
        %v1964 = vunpack.c.l.b16 %v1834
        %v1965 = vunpack.c.l.b16 %v1835
        %v1966 = vunpack.c.l.b16 %v1836
        %v1967 = vunpack.c.l.b16 %v1837
        %v1968 = vunpack.c.l.b16 %v1838
        %v1969 = vunpack.c.l.b16 %v1839
        %v1970 = vunpack.c.l.b16 %v1840
        %v1971 = vunpack.c.l.b16 %v1841
        %v1972 = vunpack.c.l.b16 %v1842
        %v1973 = vunpack.c.l.b16 %v1843
        %v1974 = vunpack.c.l.b16 %v1844
        %v1975 = vunpack.c.l.b16 %v1845
        %v1976 = vunpack.c.l.b16 %v1846
        %v1977 = vunpack.c.l.b16 %v1847
        %v1978 = vunpack.c.l.b16 %v1848
        %v1979 = vunpack.c.l.b16 %v1849
        %v1980 = vunpack.c.l.b16 %v1850
        %v1981 = vunpack.c.l.b16 %v1851
        %v1982 = vunpack.c.l.b16 %v1852
        %v1983 = vunpack.c.l.b16 %v1853
        %v1984 = vunpack.c.l.b16 %v1854
        %v1985 = vunpack.c.l.b16 %v1855
        %v1986 = vunpack.c.l.b16 %v1856
        %v1987 = vunpack.c.l.b16 %v1857
        %v1988 = vunpack.c.l.b16 %v1858
        %v1989 = vunpack.c.l.b16 %v1859
        %v1990 = vunpack.c.l.b16 %v1860
        %v1991 = vunpack.c.l.b16 %v1861
        %v1992 = vunpack.c.l.b16 %v1862
        %v1993 = vunpack.c.l.b16 %v1863
        %v1994 = vunpack.c.l.b16 %v1864
        %v1995 = vunpack.c.l.b16 %v1865
        %v1996 = vunpack.c.l.b16 %v1866
        %v1997 = vunpack.c.l.b16 %v1867
        %v1998 = vunpack.c.l.b16 %v1868
        %v1999 = vunpack.c.l.b16 %v1869
        %v2000 = vunpack.c.l.b16 %v1870
        %v2001 = vunpack.c.l.b16 %v1871
        %v2002 = vunpack.c.l.b16 %v1872
        %v2003 = vunpack.c.l.b16 %v1873
        %v2004 = vunpack.c.l.b16 %v1874
        %v2005 = vunpack.c.l.b16 %v1875
        %v2006 = vunpack.c.l.b16 %v1876
        %v2007 = vunpack.c.l.b16 %v1877
        %v2008 = vunpack.c.l.b16 %v1878
        %v2009 = vunpack.c.l.b16 %v1879
        %v2010 = vunpack.c.l.b16 %v1880
        %v2011 = vunpack.c.l.b16 %v1881
        %v2012 = vunpack.c.l.b16 %v1882
        %v2013 = vunpack.c.l.b16 %v1883
        %v2014 = vunpack.c.l.b16 %v1884
        %v2015 = vunpack.c.l.b16 %v1885
        %v2016 = vunpack.c.l.b16 %v1886
        %v2017 = vunpack.c.l.b16 %v1887
        %v2018 = vunpack.c.l.b16 %v1888
        %v2019 = vunpack.c.l.b16 %v1889
        %v2020 = vunpack.c.l.b16 %v1890
        %v2021 = vunpack.c.l.b16 %v1891
        %v2022 = vunpack.c.l.b16 %v1892
        %v2023 = vunpack.c.l.b16 %v1893
        %v2024 = vpack.c.b16 %v1960, %v1959
        %v2025 = vpack.c.b16 %v1962, %v1961
        %v2026 = vpack.c.b16 %v1964, %v1963
        %v2027 = vpack.c.b16 %v1966, %v1965
        %v2028 = vpack.c.b16 %v1968, %v1967
        %v2029 = vpack.c.b16 %v1970, %v1969
        %v2030 = vpack.c.b16 %v1972, %v1971
        %v2031 = vpack.c.b16 %v1974, %v1973
        %v2032 = vpack.c.b16 %v1976, %v1975
        %v2033 = vpack.c.b16 %v1978, %v1977
        %v2034 = vpack.c.b16 %v1980, %v1979
        %v2035 = vpack.c.b16 %v1982, %v1981
        %v2036 = vpack.c.b16 %v1984, %v1983
        %v2037 = vpack.c.b16 %v1986, %v1985
        %v2038 = vpack.c.b16 %v1988, %v1987
        %v2039 = vpack.c.b16 %v1990, %v1989
        %v2040 = vpack.c.b16 %v1992, %v1991
        %v2041 = vpack.c.b16 %v1994, %v1993
        %v2042 = vpack.c.b16 %v1996, %v1995
        %v2043 = vpack.c.b16 %v1998, %v1997
        %v2044 = vpack.c.b16 %v2000, %v1999
        %v2045 = vpack.c.b16 %v2002, %v2001
        %v2046 = vpack.c.b16 %v2004, %v2003
        %v2047 = vpack.c.b16 %v2006, %v2005
        %v2048 = vpack.c.b16 %v2008, %v2007
        %v2049 = vpack.c.b16 %v2010, %v2009
        %v2050 = vpack.c.b16 %v2012, %v2011
        %v2051 = vpack.c.b16 %v2014, %v2013
        %v2052 = vpack.c.b16 %v2016, %v2015
        %v2053 = vpack.c.b16 %v2018, %v2017
        %v2054 = vpack.c.b16 %v2020, %v2019
        %v2055 = vpack.c.b16 %v2022, %v2021
        %v2056 = vpack.c.b16 %v2023, %v2023
        %vm2089 = vcmask 15360
        %v2091 = vsel %vm2089, %v1823, 0
        %v2094 = vsel %vm2089, %v1828, 0
        %vm2096 = vcmask 1040384
        %v2098 = vsel %vm2096, %v2056, 0
        %2100 = vmatprep.subr.bf16.mxu0 0
        %2101 = vmatpush1.bf16.msra.mxu0 %v2031
        %2102 = vmatprep.subr.bf16.mxu0 0
        %2103 = vmatpush1.bf16.msra.mxu0 %v2030
        %2104 = vmatprep.subr.bf16.mxu0 0
        %2105 = vmatpush1.bf16.msra.mxu0 %v2029
        %2106 = vmatprep.subr.bf16.mxu0 0
        %2107 = vmatpush1.bf16.msra.mxu0 %v2028
        %2108 = vmatprep.subr.bf16.mxu0 0
        %2109 = vmatpush1.bf16.msra.mxu0 %v2027
        %2110 = vmatprep.subr.bf16.mxu0 0
        %2111 = vmatpush1.bf16.msra.mxu0 %v2026
        %2112 = vmatprep.subr.bf16.mxu0 0
        %2113 = vmatpush1.bf16.msra.mxu0 %v2025
        %2114 = vmatprep.subr.bf16.mxu0 0
        %2115 = vmatpush1.bf16.msra.mxu0 %v2024
        %2116 = vmatprep.subr.bf16.mxu0 0
        %2117 = vmatpush2.bf16.msra.mxu0 %v2039
        %2118 = vmatprep.subr.bf16.mxu0 0
        %2119 = vmatpush2.bf16.msra.mxu0 %v2038
        %2120 = vmatprep.subr.bf16.mxu0 0
        %2121 = vmatpush2.bf16.msra.mxu0 %v2037
        %2122 = vmatprep.subr.bf16.mxu0 0
        %2123 = vmatpush2.bf16.msra.mxu0 %v2036
        %2124 = vmatprep.subr.bf16.mxu0 0
        %2125 = vmatpush2.bf16.msra.mxu0 %v2035
        %2126 = vmatprep.subr.bf16.mxu0 0
        %2127 = vmatpush2.bf16.msra.mxu0 %v2034
        %2128 = vmatprep.subr.bf16.mxu0 0
        %2129 = vmatpush2.bf16.msra.mxu0 %v2033
        %2130 = vmatprep.subr.bf16.mxu0 0
        %2131 = vmatpush2.bf16.msra.mxu0 %v2032
        %2132 = vmatprep.mubr.bf16.mxu0 %v1820
        %2133 = vmatmul.mubr.bf16.gmra.mxu0 %v1819
        %v2134 = vpop.f32.mrf.mxu0
        %v2135 = vadd.f32 0.0, %v2134
        %v2136 = vpop.f32.mrf.mxu0
        %v2137 = vpop.f32.mrf.mxu0
        %v2138 = vadd.f32 0.0, %v2137
        %v2139 = vpop.f32.mrf.mxu0
        %2140 = vmatprep.mubr.bf16.mxu0 %v1825
        %2141 = vmatmul.mubr.bf16.gmra.mxu0 %v1824
        %v2142 = vpop.f32.mrf.mxu0
        %v2143 = vadd.f32 0.0, %v2142
        %v2144 = vpop.f32.mrf.mxu0
        %v2145 = vpop.f32.mrf.mxu0
        %v2146 = vpop.f32.mrf.mxu0
        %2147 = vdwg.mxu0
        %2148 = vmatprep.subr.bf16.mxu0 0
        %2149 = vmatpush1.bf16.msra.mxu0 %v2047
        %2150 = vmatprep.subr.bf16.mxu0 0
        %2151 = vmatpush1.bf16.msra.mxu0 %v2046
        %2152 = vmatprep.subr.bf16.mxu0 0
        %2153 = vmatpush1.bf16.msra.mxu0 %v2045
        %2154 = vmatprep.subr.bf16.mxu0 0
        %2155 = vmatpush1.bf16.msra.mxu0 %v2044
        %2156 = vmatprep.subr.bf16.mxu0 0
        %2157 = vmatpush1.bf16.msra.mxu0 %v2043
        %2158 = vmatprep.subr.bf16.mxu0 0
        %2159 = vmatpush1.bf16.msra.mxu0 %v2042
        %2160 = vmatprep.subr.bf16.mxu0 0
        %2161 = vmatpush1.bf16.msra.mxu0 %v2041
        %2162 = vmatprep.subr.bf16.mxu0 0
        %2163 = vmatpush1.bf16.msra.mxu0 %v2040
        %2164 = vmatprep.subr.bf16.mxu0 0
        %2165 = vmatpush2.bf16.msra.mxu0 %v2055
        %2166 = vmatprep.subr.bf16.mxu0 0
        %2167 = vmatpush2.bf16.msra.mxu0 %v2054
        %2168 = vmatprep.subr.bf16.mxu0 0
        %2169 = vmatpush2.bf16.msra.mxu0 %v2053
        %2170 = vmatprep.subr.bf16.mxu0 0
        %2171 = vmatpush2.bf16.msra.mxu0 %v2052
        %2172 = vmatprep.subr.bf16.mxu0 0
        %2173 = vmatpush2.bf16.msra.mxu0 %v2051
        %2174 = vmatprep.subr.bf16.mxu0 0
        %2175 = vmatpush2.bf16.msra.mxu0 %v2050
        %2176 = vmatprep.subr.bf16.mxu0 0
        %2177 = vmatpush2.bf16.msra.mxu0 %v2049
        %2178 = vmatprep.subr.bf16.mxu0 0
        %2179 = vmatpush2.bf16.msra.mxu0 %v2048
        %2180 = vmatprep.mubr.bf16.mxu0 %v1822
        %2181 = vmatmul.mubr.bf16.gmra.mxu0 %v1821
        %v2182 = vpop.f32.mrf.mxu0
        %v2183 = vadd.f32 %v2135, %v2182
        %v2184 = vpop.f32.mrf.mxu0
        %v2185 = vpop.f32.mrf.mxu0
        %v2186 = vadd.f32 %v2138, %v2185
        %v2187 = vpop.f32.mrf.mxu0
        %2188 = vmatprep.mubr.bf16.mxu0 %v1827
        %2189 = vmatmul.mubr.bf16.gmra.mxu0 %v1826
        %v2190 = vpop.f32.mrf.mxu0
        %v2191 = vadd.f32 %v2143, %v2190
        %v2192 = vpop.f32.mrf.mxu0
        %v2193 = vpop.f32.mrf.mxu0
        %v2194 = vpop.f32.mrf.mxu0
        %2195 = vdwg.mxu0
        %2196 = vmatprep.subr.bf16.mxu0 0
        %2197 = vmatpush1.bf16.msra.mxu0 0
        %2198 = vmatprep.subr.bf16.mxu0 0
        %2199 = vmatpush1.bf16.msra.mxu0 0
        %2200 = vmatprep.subr.bf16.mxu0 0
        %2201 = vmatpush1.bf16.msra.mxu0 0
        %2202 = vmatprep.subr.bf16.mxu0 0
        %2203 = vmatpush1.bf16.msra.mxu0 0
        %2204 = vmatprep.subr.bf16.mxu0 0
        %2205 = vmatpush1.bf16.msra.mxu0 0
        %2206 = vmatprep.subr.bf16.mxu0 0
        %2207 = vmatpush1.bf16.msra.mxu0 0
        %2208 = vmatprep.subr.bf16.mxu0 0
        %2209 = vmatpush1.bf16.msra.mxu0 0
        %2210 = vmatprep.subr.bf16.mxu0 0
        %2211 = vmatpush1.bf16.msra.mxu0 %v2098
        %2212 = vmatprep.subr.bf16.mxu0 0
        %2213 = vmatpush2.bf16.msra.mxu0 0
        %2214 = vmatprep.subr.bf16.mxu0 0
        %2215 = vmatpush2.bf16.msra.mxu0 0
        %2216 = vmatprep.subr.bf16.mxu0 0
        %2217 = vmatpush2.bf16.msra.mxu0 0
        %2218 = vmatprep.subr.bf16.mxu0 0
        %2219 = vmatpush2.bf16.msra.mxu0 0
        %2220 = vmatprep.subr.bf16.mxu0 0
        %2221 = vmatpush2.bf16.msra.mxu0 0
        %2222 = vmatprep.subr.bf16.mxu0 0
        %2223 = vmatpush2.bf16.msra.mxu0 0
        %2224 = vmatprep.subr.bf16.mxu0 0
        %2225 = vmatpush2.bf16.msra.mxu0 0
        %2226 = vmatprep.subr.bf16.mxu0 0
        %2227 = vmatpush2.bf16.msra.mxu0 0
        %2228 = vmatprep.mubr.bf16.mxu0 0
        %2229 = vmatmul.mubr.bf16.gmra.mxu0 %v2091
        %v2230 = vpop.f32.mrf.mxu0
        %v2231 = vadd.f32 %v2183, %v2230
        %v2232 = vpop.f32.mrf.mxu0
        %v2233 = vpop.f32.mrf.mxu0
        %v2234 = vadd.f32 %v2186, %v2233
        %v2235 = vpop.f32.mrf.mxu0
        %2236 = vmatprep.mubr.bf16.mxu0 0
        %2237 = vmatmul.mubr.bf16.gmra.mxu0 %v2094
        %v2238 = vpop.f32.mrf.mxu0
        %v2239 = vadd.f32 %v2191, %v2238
        %v2240 = vpop.f32.mrf.mxu0
        %v2241 = vpop.f32.mrf.mxu0
        %v2242 = vpop.f32.mrf.mxu0
        %2243 = vdwg.mxu0
        %v2244 = vmax.f32 %v2231, 1e-10
        %v2245 = vmax.f32 %v2234, 1e-10
        %v2246 = vmax.f32 %v2239, 1e-10
        %v2247 = vlog2.pop %v2244
        %v2248 = vmul.f32 %v2247, 0.6931472
        %v2249 = vlog2.pop %v2245
        %v2250 = vmul.f32 %v2249, 0.6931472
        %v2251 = vlog2.pop %v2246
        %v2252 = vmul.f32 %v2251, 0.6931472
        %v2253 = vmul.f32 %v2248, 0.4342945
        %v2254 = vmul.f32 %v2250, 0.4342945
        %v2255 = vmul.f32 %v2252, 0.4342945
        %v2256 = vld [vmem:[#allocation3] sm:$0x1]
        %v2258 = vlaneseq
        %v2259 = vshrl.u32 %v2258, 7
        %v2260 = vsub.s32 0, %v2259
        %v2261 = vrot.slane %v2256, %v2260
        %2262 = vset.pattern.permute.xlu0 0
        %2263 = vperm.xlu0 %2262, %v2261
        %v2264 = vpop.permute.xlu0 %2263
        %v2266 = vmul.f32 %v2253, %v2264
        %v2267 = vmul.f32 %v2254, %v2264
        %v2268 = vmul.f32 %v2255, %v2264
        %v2269 = vld [vmem:[#allocation4] sm:$0x1]
        %v2271 = vlaneseq
        %v2272 = vshrl.u32 %v2271, 7
        %v2273 = vsub.s32 0, %v2272
        %v2274 = vrot.slane %v2269, %v2273
        %2275 = vset.pattern.permute.xlu0 0
        %2276 = vperm.xlu0 %2275, %v2274
        %v2277 = vpop.permute.xlu0 %2276
        %v2279 = vadd.f32 %v2266, %v2277
        %v2280 = vadd.f32 %v2267, %v2277
        %v2281 = vadd.f32 %v2268, %v2277
        %v2282 = vld [vmem:[%s5] sm:$0xf]
        %v2283 = vld [vmem:[%s5 + $0x4] sm:$0xf]
        %v2284 = vld [vmem:[%s5 + $0x8] sm:$0xf]
        %v2285 = vld [vmem:[%s5 + $0xc] sm:$0xf]
        %v2286 = vld [vmem:[%s5 + $0x10] sm:$0xf]
        %v2287 = vld [vmem:[%s5 + $0x14] sm:$0xf]
        %v2288 = vld [vmem:[%s5 + $0x18] sm:$0xf]
        %v2289 = vld [vmem:[%s5 + $0x1c] sm:$0xf]
        %v2290 = vld [vmem:[%s5 + $0x20] sm:$0xf]
        %v2291 = vld [vmem:[%s5 + $0x24] sm:$0xf]
        %v2292 = vld [vmem:[%s5 + $0x28] sm:$0xf]
        %v2293 = vld [vmem:[%s5 + $0x2c] sm:$0xf]
        %v2294 = vld [vmem:[%s5 + $0x30] sm:$0xf]
        %v2295 = vld [vmem:[%s5 + $0x34] sm:$0xf]
        %v2296 = vld [vmem:[%s5 + $0x38] sm:$0xf]
        %v2297 = vld [vmem:[%s5 + $0x3c] sm:$0xf]
        %v2298 = vld [vmem:[%s5 + $0x40] sm:$0xf]
        %v2299 = vld [vmem:[%s5 + $0x44] sm:$0xf]
        %v2300 = vld [vmem:[%s5 + $0x48] sm:$0xf]
        %v2301 = vld [vmem:[%s5 + $0x4c] sm:$0xf]
        %v2302 = vld [vmem:[%s5 + $0x50] sm:$0xf]
        %v2303 = vld [vmem:[%s5 + $0x54] sm:$0xf]
        %v2304 = vld [vmem:[%s5 + $0x58] sm:$0xf]
        %v2305 = vld [vmem:[%s5 + $0x5c] sm:$0xf]
        %v2306 = vld [vmem:[%s5 + $0x60] sm:$0xf]
        %v2307 = vld [vmem:[%s5 + $0x64] sm:$0xf]
        %v2308 = vld [vmem:[%s5 + $0x68] sm:$0xf]
        %v2309 = vld [vmem:[%s5 + $0x6c] sm:$0xf]
        %v2310 = vld [vmem:[%s5 + $0x70] sm:$0xf]
        %v2311 = vld [vmem:[%s5 + $0x74] sm:$0xf]
        %v2312 = vld [vmem:[%s5 + $0x78] sm:$0xf]
        %v2313 = vld [vmem:[%s5 + $0x7c] sm:$0xf]
        %v2314 = vld [vmem:[%s5 + $0x80] sm:$0xf]
        %v2315 = vld [vmem:[%s5 + $0x84] sm:$0xf]
        %v2316 = vld [vmem:[%s5 + $0x88] sm:$0xf]
        %v2317 = vld [vmem:[%s5 + $0x8c] sm:$0xf]
        %v2318 = vld [vmem:[%s6] sm:$0x1]
        %vm2322 = vcmask 1042432
        %v2323 = vrot.slane %v2279, 5
        %v2324 = vrot.slane %v2280, 5
        %v2325 = vsel %vm2322, %v2323, %v2324
        %v2326 = vrot.slane %v2281, 5
        %v2327 = vsel %vm2322, %v2324, %v2326
        %v2331 = vsel %vm2322, 0.0, %v2323
        %vm2332 = vcmask 1043456
        %v2333 = vsel %vm2332, %v2327, 0.0
        %v2336 = vrot.slane %v2331, 1
        %v2337 = vrot.slane %v2325, 1
        %v2338 = vsel %vm455, %v2336, %v2337
        %v2339 = vrot.slane %v2333, 1
        %v2340 = vsel %vm455, %v2337, %v2339
        %2341 = vrot.lane.b32.xlu0 %v2338, 96
        %v2342 = vpop.permute.xlu0 %2341
        %2343 = vrot.lane.b32.xlu0 %v2340, 96
        %v2344 = vpop.permute.xlu0 %2343
        %2345 = vrot.lane.b32.xlu0 %v2339, 96
        %v2346 = vpop.permute.xlu0 %2345
        %vm2350 = vcmask 1045504
        %v2351 = vrot.slane %v2331, 2
        %v2352 = vrot.slane %v2325, 2
        %v2353 = vsel %vm2350, %v2351, %v2352
        %v2354 = vrot.slane %v2333, 2
        %v2355 = vsel %vm2350, %v2352, %v2354
        %2356 = vrot.lane.b32.xlu0 %v2353, 64
        %v2357 = vpop.permute.xlu0 %2356
        %2358 = vrot.lane.b32.xlu0 %v2355, 64
        %v2359 = vpop.permute.xlu0 %2358
        %2360 = vrot.lane.b32.xlu0 %v2354, 64
        %v2361 = vpop.permute.xlu0 %2360
        %vm2365 = vcmask 785408
        %v2366 = vsel %vm2365, %v2331, %v2342
        %v2367 = vsel %vm2365, %v2325, %v2344
        %v2368 = vsel %vm2365, %v2333, %v2346
        %vm2369 = vcmask 523264
        %v2370 = vsel %vm2369, %v2342, %v2357
        %v2371 = vsel %vm2369, %v2344, %v2359
        %v2372 = vsel %vm2369, %v2346, %v2361
        %v2373 = vpack.c.bf16 %v2367, %v2366
        %v2374 = vpack.c.bf16 %v2371, %v2370
        %v2375 = vpack.c.bf16 %v2359, %v2357
        %v2376 = vpack.c.bf16 %v2368, %v2368
        %v2377 = vpack.c.bf16 %v2372, %v2372
        %v2378 = vpack.c.bf16 %v2361, %v2361
        %v2380 = vlaneseq
        %v2381 = vshrl.u32 %v2380, 7
        %v2382 = vsub.s32 0, %v2381
        %v2383 = vrot.slane %v2318, %v2382
        %v2421 = vunpack.c.l.b16 %v2282
        %v2422 = vunpack.c.l.b16 %v2283
        %v2423 = vunpack.c.l.b16 %v2284
        %v2424 = vunpack.c.l.b16 %v2285
        %v2425 = vunpack.c.l.b16 %v2286
        %v2426 = vunpack.c.l.b16 %v2287
        %v2427 = vunpack.c.l.b16 %v2288
        %v2428 = vunpack.c.l.b16 %v2289
        %v2429 = vunpack.c.l.b16 %v2290
        %v2430 = vunpack.c.l.b16 %v2291
        %v2431 = vunpack.c.l.b16 %v2292
        %v2432 = vunpack.c.l.b16 %v2293
        %v2433 = vunpack.c.l.b16 %v2294
        %v2434 = vunpack.c.l.b16 %v2295
        %v2435 = vunpack.c.l.b16 %v2296
        %v2436 = vunpack.c.l.b16 %v2297
        %v2437 = vunpack.c.l.b16 %v2298
        %v2438 = vunpack.c.l.b16 %v2299
        %v2439 = vunpack.c.l.b16 %v2300
        %v2440 = vunpack.c.l.b16 %v2301
        %v2441 = vunpack.c.l.b16 %v2302
        %v2442 = vunpack.c.l.b16 %v2303
        %v2443 = vunpack.c.l.b16 %v2304
        %v2444 = vunpack.c.l.b16 %v2305
        %v2445 = vunpack.c.l.b16 %v2306
        %v2446 = vunpack.c.l.b16 %v2307
        %v2447 = vunpack.c.l.b16 %v2308
        %v2448 = vunpack.c.l.b16 %v2309
        %v2449 = vunpack.c.l.b16 %v2310
        %v2450 = vunpack.c.l.b16 %v2311
        %v2451 = vunpack.c.l.b16 %v2312
        %v2452 = vunpack.c.l.b16 %v2313
        %v2453 = vunpack.c.l.b16 %v2314
        %v2454 = vunpack.c.l.b16 %v2315
        %v2455 = vunpack.c.l.b16 %v2316
        %v2456 = vunpack.c.l.b16 %v2317
        %v2457 = vpack.c.b16 %v2422, %v2421
        %v2458 = vpack.c.b16 %v2424, %v2423
        %v2459 = vpack.c.b16 %v2426, %v2425
        %v2460 = vpack.c.b16 %v2428, %v2427
        %v2461 = vpack.c.b16 %v2430, %v2429
        %v2462 = vpack.c.b16 %v2432, %v2431
        %v2463 = vpack.c.b16 %v2434, %v2433
        %v2464 = vpack.c.b16 %v2436, %v2435
        %v2465 = vpack.c.b16 %v2438, %v2437
        %v2466 = vpack.c.b16 %v2440, %v2439
        %v2467 = vpack.c.b16 %v2442, %v2441
        %v2468 = vpack.c.b16 %v2444, %v2443
        %v2469 = vpack.c.b16 %v2446, %v2445
        %v2470 = vpack.c.b16 %v2448, %v2447
        %v2471 = vpack.c.b16 %v2450, %v2449
        %v2472 = vpack.c.b16 %v2452, %v2451
        %v2473 = vpack.c.b16 %v2454, %v2453
        %v2474 = vpack.c.b16 %v2456, %v2455
        %vm2493 = vcmask 261120
        %v2495 = vsel %vm2493, %v2375, 0
        %v2498 = vsel %vm2493, %v2378, 0
        %2500 = vmatprep.subr.bf16.mxu0 0
        %2501 = vmatpush1.bf16.msra.mxu0 %v2464
        %2502 = vmatprep.subr.bf16.mxu0 0
        %2503 = vmatpush1.bf16.msra.mxu0 %v2463
        %2504 = vmatprep.subr.bf16.mxu0 0
        %2505 = vmatpush1.bf16.msra.mxu0 %v2462
        %2506 = vmatprep.subr.bf16.mxu0 0
        %2507 = vmatpush1.bf16.msra.mxu0 %v2461
        %2508 = vmatprep.subr.bf16.mxu0 0
        %2509 = vmatpush1.bf16.msra.mxu0 %v2460
        %2510 = vmatprep.subr.bf16.mxu0 0
        %2511 = vmatpush1.bf16.msra.mxu0 %v2459
        %2512 = vmatprep.subr.bf16.mxu0 0
        %2513 = vmatpush1.bf16.msra.mxu0 %v2458
        %2514 = vmatprep.subr.bf16.mxu0 0
        %2515 = vmatpush1.bf16.msra.mxu0 %v2457
        %2516 = vmatprep.subr.bf16.mxu0 0
        %2517 = vmatpush2.bf16.msra.mxu0 %v2472
        %2518 = vmatprep.subr.bf16.mxu0 0
        %2519 = vmatpush2.bf16.msra.mxu0 %v2471
        %2520 = vmatprep.subr.bf16.mxu0 0
        %2521 = vmatpush2.bf16.msra.mxu0 %v2470
        %2522 = vmatprep.subr.bf16.mxu0 0
        %2523 = vmatpush2.bf16.msra.mxu0 %v2469
        %2524 = vmatprep.subr.bf16.mxu0 0
        %2525 = vmatpush2.bf16.msra.mxu0 %v2468
        %2526 = vmatprep.subr.bf16.mxu0 0
        %2527 = vmatpush2.bf16.msra.mxu0 %v2467
        %2528 = vmatprep.subr.bf16.mxu0 0
        %2529 = vmatpush2.bf16.msra.mxu0 %v2466
        %2530 = vmatprep.subr.bf16.mxu0 0
        %2531 = vmatpush2.bf16.msra.mxu0 %v2465
        %2532 = vmatprep.mubr.bf16.mxu0 %v2374
        %2533 = vmatmul.mubr.bf16.gmra.mxu0 %v2373
        %v2534 = vpop.f32.mrf.mxu0
        %v2535 = vadd.f32 %v2383, %v2534
        %v2536 = vpop.f32.mrf.mxu0
        %v2537 = vpop.f32.mrf.mxu0
        %v2538 = vadd.f32 %v2383, %v2537
        %v2539 = vpop.f32.mrf.mxu0
        %2540 = vmatprep.mubr.bf16.mxu0 %v2377
        %2541 = vmatmul.mubr.bf16.gmra.mxu0 %v2376
        %v2542 = vpop.f32.mrf.mxu0
        %v2543 = vadd.f32 %v2383, %v2542
        %v2544 = vpop.f32.mrf.mxu0
        %v2545 = vpop.f32.mrf.mxu0
        %v2546 = vpop.f32.mrf.mxu0
        %2547 = vdwg.mxu0
        %2548 = vmatprep.subr.bf16.mxu0 0
        %2549 = vmatpush1.bf16.msra.mxu0 0
        %2550 = vmatprep.subr.bf16.mxu0 0
        %2551 = vmatpush1.bf16.msra.mxu0 0
        %2552 = vmatprep.subr.bf16.mxu0 0
        %2553 = vmatpush1.bf16.msra.mxu0 0
        %2554 = vmatprep.subr.bf16.mxu0 0
        %2555 = vmatpush1.bf16.msra.mxu0 0
        %2556 = vmatprep.subr.bf16.mxu0 0
        %2557 = vmatpush1.bf16.msra.mxu0 0
        %2558 = vmatprep.subr.bf16.mxu0 0
        %2559 = vmatpush1.bf16.msra.mxu0 0
        %2560 = vmatprep.subr.bf16.mxu0 0
        %2561 = vmatpush1.bf16.msra.mxu0 %v2474
        %2562 = vmatprep.subr.bf16.mxu0 0
        %2563 = vmatpush1.bf16.msra.mxu0 %v2473
        %2564 = vmatprep.subr.bf16.mxu0 0
        %2565 = vmatpush2.bf16.msra.mxu0 0
        %2566 = vmatprep.subr.bf16.mxu0 0
        %2567 = vmatpush2.bf16.msra.mxu0 0
        %2568 = vmatprep.subr.bf16.mxu0 0
        %2569 = vmatpush2.bf16.msra.mxu0 0
        %2570 = vmatprep.subr.bf16.mxu0 0
        %2571 = vmatpush2.bf16.msra.mxu0 0
        %2572 = vmatprep.subr.bf16.mxu0 0
        %2573 = vmatpush2.bf16.msra.mxu0 0
        %2574 = vmatprep.subr.bf16.mxu0 0
        %2575 = vmatpush2.bf16.msra.mxu0 0
        %2576 = vmatprep.subr.bf16.mxu0 0
        %2577 = vmatpush2.bf16.msra.mxu0 0
        %2578 = vmatprep.subr.bf16.mxu0 0
        %2579 = vmatpush2.bf16.msra.mxu0 0
        %2580 = vmatprep.mubr.bf16.mxu0 0
        %2581 = vmatmul.mubr.bf16.gmra.mxu0 %v2495
        %v2582 = vpop.f32.mrf.mxu0
        %v2583 = vadd.f32 %v2535, %v2582
        %v2584 = vpop.f32.mrf.mxu0
        %v2585 = vpop.f32.mrf.mxu0
        %v2586 = vadd.f32 %v2538, %v2585
        %v2587 = vpop.f32.mrf.mxu0
        %2588 = vmatprep.mubr.bf16.mxu0 0
        %2589 = vmatmul.mubr.bf16.gmra.mxu0 %v2498
        %v2590 = vpop.f32.mrf.mxu0
        %v2591 = vadd.f32 %v2543, %v2590
        %v2592 = vpop.f32.mrf.mxu0
        %v2593 = vpop.f32.mrf.mxu0
        %v2594 = vpop.f32.mrf.mxu0
        %2595 = vdwg.mxu0
        %v2596 = vmax.f32 %v2583, 0.0
        %v2597 = vmax.f32 %v2586, 0.0
        %v2598 = vmax.f32 %v2591, 0.0
        %2599 = vst.msk [vmem:[#allocation2] sm:$0xff] %vm2493, %v2596
        %2600 = vst.msk [vmem:[#allocation2 + $0x8] sm:$0xff] %vm2493, %v2597
        %vm2601 = vcmask 258048
        %2602 = vst.msk [vmem:[#allocation2 + $0x10] sm:$0x1f] %vm2601, %v2598
        %v2603 = vld [vmem:[#allocation2] ss:$3 sm:$0x7f]
        %s2604 = scalar_lea.vmem [#allocation2], 1
        %v2605 = vld [vmem:[%s2604] ss:$3 sm:$0x7f]
        %s2606 = scalar_lea.vmem [#allocation2], 2
        %v2607 = vld [vmem:[%s2606] ss:$3 sm:$0x7f]
        %v2608 = vmax.f32 %v2603, %v2605
        %v2609 = vmax.f32 %v2608, %v2607
        %v2610 = vld [vmem:[%s7] sm:$0xf]
        %v2611 = vld [vmem:[%s7 + $0x4] sm:$0xf]
        %v2612 = vld [vmem:[%s7 + $0x8] sm:$0xf]
        %v2613 = vld [vmem:[%s7 + $0xc] sm:$0xf]
        %v2614 = vld [vmem:[%s7 + $0x10] sm:$0xf]
        %v2615 = vld [vmem:[%s7 + $0x14] sm:$0xf]
        %v2616 = vld [vmem:[%s7 + $0x18] sm:$0xf]
        %v2617 = vld [vmem:[%s7 + $0x1c] sm:$0xf]
        %v2618 = vld [vmem:[%s7 + $0x20] sm:$0xf]
        %v2619 = vld [vmem:[%s7 + $0x24] sm:$0xf]
        %v2620 = vld [vmem:[%s7 + $0x28] sm:$0xf]
        %v2621 = vld [vmem:[%s7 + $0x2c] sm:$0xf]
        %v2622 = vld [vmem:[%s8] sm:$0x1]
        %v2624 = vrot.slane %v2609, 5
        %v2626 = vsel %vm2322, 0.0, %v2624
        %vm2627 = vcmask 1041408
        %v2628 = vsel %vm2627, %v2624, 0.0
        %v2631 = vrot.slane %v2626, 1
        %v2632 = vrot.slane %v2628, 1
        %v2633 = vsel %vm455, %v2631, %v2632
        %2634 = vrot.lane.b32.xlu0 %v2633, 32
        %v2635 = vpop.permute.xlu0 %2634
        %2636 = vrot.lane.b32.xlu0 %v2632, 32
        %v2637 = vpop.permute.xlu0 %2636
        %v2640 = vrot.slane %v2626, 2
        %v2641 = vrot.slane %v2628, 2
        %v2642 = vsel %vm2350, %v2640, %v2641
        %2643 = vrot.lane.b32.xlu0 %v2642, 64
        %v2644 = vpop.permute.xlu0 %2643
        %2645 = vrot.lane.b32.xlu0 %v2641, 64
        %v2646 = vpop.permute.xlu0 %2645
        %v2649 = vsel %vm2493, %v2626, %v2635
        %v2650 = vsel %vm2493, %v2628, %v2637
        %v2651 = vsel %vm2369, %v2649, %v2644
        %v2652 = vsel %vm2369, %v2650, %v2646
        %v2653 = vpack.c.bf16 %v2652, %v2651
        %v2655 = vlaneseq
        %v2656 = vshrl.u32 %v2655, 7
        %v2657 = vsub.s32 0, %v2656
        %v2658 = vrot.slane %v2622, %v2657
        %v2672 = vunpack.c.l.b16 %v2610
        %v2673 = vunpack.c.l.b16 %v2611
        %v2674 = vunpack.c.l.b16 %v2612
        %v2675 = vunpack.c.l.b16 %v2613
        %v2676 = vunpack.c.l.b16 %v2614
        %v2677 = vunpack.c.l.b16 %v2615
        %v2678 = vunpack.c.l.b16 %v2616
        %v2679 = vunpack.c.l.b16 %v2617
        %v2680 = vunpack.c.l.b16 %v2618
        %v2681 = vunpack.c.l.b16 %v2619
        %v2682 = vunpack.c.l.b16 %v2620
        %v2683 = vunpack.c.l.b16 %v2621
        %v2684 = vpack.c.b16 %v2673, %v2672
        %v2685 = vpack.c.b16 %v2675, %v2674
        %v2686 = vpack.c.b16 %v2677, %v2676
        %v2687 = vpack.c.b16 %v2679, %v2678
        %v2688 = vpack.c.b16 %v2681, %v2680
        %v2689 = vpack.c.b16 %v2683, %v2682
        %v2697 = vsel %vm2365, %v2653, 0
        %2699 = vmatprep.subr.bf16.mxu0 0
        %2700 = vmatpush1.bf16.msra.mxu0 0
        %2701 = vmatprep.subr.bf16.mxu0 0
        %2702 = vmatpush1.bf16.msra.mxu0 0
        %2703 = vmatprep.subr.bf16.mxu0 0
        %2704 = vmatpush1.bf16.msra.mxu0 %v2689
        %2705 = vmatprep.subr.bf16.mxu0 0
        %2706 = vmatpush1.bf16.msra.mxu0 %v2688
        %2707 = vmatprep.subr.bf16.mxu0 0
        %2708 = vmatpush1.bf16.msra.mxu0 %v2687
        %2709 = vmatprep.subr.bf16.mxu0 0
        %2710 = vmatpush1.bf16.msra.mxu0 %v2686
        %2711 = vmatprep.subr.bf16.mxu0 0
        %2712 = vmatpush1.bf16.msra.mxu0 %v2685
        %2713 = vmatprep.subr.bf16.mxu0 0
        %2714 = vmatpush1.bf16.msra.mxu0 %v2684
        %2715 = vmatprep.subr.bf16.mxu0 0
        %2716 = vmatpush2.bf16.msra.mxu0 0
        %2717 = vmatprep.subr.bf16.mxu0 0
        %2718 = vmatpush2.bf16.msra.mxu0 0
        %2719 = vmatprep.subr.bf16.mxu0 0
        %2720 = vmatpush2.bf16.msra.mxu0 0
        %2721 = vmatprep.subr.bf16.mxu0 0
        %2722 = vmatpush2.bf16.msra.mxu0 0
        %2723 = vmatprep.subr.bf16.mxu0 0
        %2724 = vmatpush2.bf16.msra.mxu0 0
        %2725 = vmatprep.subr.bf16.mxu0 0
        %2726 = vmatpush2.bf16.msra.mxu0 0
        %2727 = vmatprep.subr.bf16.mxu0 0
        %2728 = vmatpush2.bf16.msra.mxu0 0
        %2729 = vmatprep.subr.bf16.mxu0 0
        %2730 = vmatpush2.bf16.msra.mxu0 0
        %2731 = vmatprep.mubr.bf16.mxu0 0
        %2732 = vmatmul.mubr.bf16.gmra.mxu0 %v2697
        %v2733 = vpop.f32.mrf.mxu0
        %v2734 = vadd.f32 %v2658, %v2733
        %v2735 = vpop.f32.mrf.mxu0
        %v2736 = vpop.f32.mrf.mxu0
        %v2737 = vadd.f32 %v2658, %v2736
        %v2738 = vpop.f32.mrf.mxu0
        %2739 = vdwg.mxu0
        %v2740 = vmax.f32 %v2734, 0.0
        %v2741 = vmax.f32 %v2737, 0.0
        %2742 = vst.msk [vmem:[#allocation2] sm:$0xff] %vm2493, %v2740
        %vm2743 = vcmask 256000
        %2744 = vst.msk [vmem:[#allocation2 + $0x8] sm:$0x7] %vm2743, %v2741
        %v2745 = vld [vmem:[#allocation2] ss:$3 sm:$0x7]
        %v2746 = vld [vmem:[%s2604] ss:$3 sm:$0x7]
        %v2747 = vld [vmem:[%s2606] ss:$3 sm:$0x7]
        %v2748 = vmax.f32 %v2745, %v2746
        %v2749 = vmax.f32 %v2748, %v2747
        %v2750 = vld [vmem:[%s9] sm:$0xf]
        %v2751 = vld [vmem:[%s9 + $0x4] sm:$0xf]
        %v2752 = vld [vmem:[%s9 + $0x8] sm:$0xf]
        %v2753 = vld [vmem:[%s9 + $0xc] sm:$0xf]
        %v2754 = vld [vmem:[%s9 + $0x10] sm:$0xf]
        %v2755 = vld [vmem:[%s9 + $0x14] sm:$0xf]
        %v2756 = vld [vmem:[%s9 + $0x18] sm:$0xf]
        %v2757 = vld [vmem:[%s9 + $0x1c] sm:$0xf]
        %v2758 = vld [vmem:[%s9 + $0x20] sm:$0xf]
        %v2759 = vld [vmem:[%s9 + $0x24] sm:$0xf]
        %v2760 = vld [vmem:[%s9 + $0x28] sm:$0xf]
        %v2761 = vld [vmem:[%s9 + $0x2c] sm:$0xf]
        %v2762 = vld [vmem:[%s10] sm:$0x1]
        %v2764 = vrot.slane %v2749, 5
        %v2766 = vsel %vm2322, 0.0, %v2764
        %v2767 = vsel %vm2350, %v2766, 0.0
        %v2769 = vrot.slane %v2767, 1
        %2770 = vrot.lane.b32.xlu0 %v2769, 32
        %v2771 = vpop.permute.xlu0 %2770
        %v2774 = vrot.slane %v2767, 2
        %v2775 = vrot.slane 0.0, 2
        %v2776 = vsel %vm2350, %v2774, %v2775
        %2777 = vrot.lane.b32.xlu0 %v2776, 64
        %v2778 = vpop.permute.xlu0 %2777
        %v2780 = vsel %vm2493, %v2767, %v2771
        %v2781 = vsel %vm2369, %v2780, %v2778
        %v2782 = vpack.c.bf16 %v2781, %v2781
        %v2784 = vlaneseq
        %v2785 = vshrl.u32 %v2784, 7
        %v2786 = vsub.s32 0, %v2785
        %v2787 = vrot.slane %v2762, %v2786
        %v2801 = vunpack.c.l.b16 %v2750
        %v2802 = vunpack.c.l.b16 %v2751
        %v2803 = vunpack.c.l.b16 %v2752
        %v2804 = vunpack.c.l.b16 %v2753
        %v2805 = vunpack.c.l.b16 %v2754
        %v2806 = vunpack.c.l.b16 %v2755
        %v2807 = vunpack.c.l.b16 %v2756
        %v2808 = vunpack.c.l.b16 %v2757
        %v2809 = vunpack.c.l.b16 %v2758
        %v2810 = vunpack.c.l.b16 %v2759
        %v2811 = vunpack.c.l.b16 %v2760
        %v2812 = vunpack.c.l.b16 %v2761
        %v2813 = vpack.c.b16 %v2802, %v2801
        %v2814 = vpack.c.b16 %v2804, %v2803
        %v2815 = vpack.c.b16 %v2806, %v2805
        %v2816 = vpack.c.b16 %v2808, %v2807
        %v2817 = vpack.c.b16 %v2810, %v2809
        %v2818 = vpack.c.b16 %v2812, %v2811
        %v2826 = vsel %vm2365, %v2782, 0
        %2828 = vmatprep.subr.bf16.mxu0 0
        %2829 = vmatpush1.bf16.msra.mxu0 0
        %2830 = vmatprep.subr.bf16.mxu0 0
        %2831 = vmatpush1.bf16.msra.mxu0 0
        %2832 = vmatprep.subr.bf16.mxu0 0
        %2833 = vmatpush1.bf16.msra.mxu0 %v2818
        %2834 = vmatprep.subr.bf16.mxu0 0
        %2835 = vmatpush1.bf16.msra.mxu0 %v2817
        %2836 = vmatprep.subr.bf16.mxu0 0
        %2837 = vmatpush1.bf16.msra.mxu0 %v2816
        %2838 = vmatprep.subr.bf16.mxu0 0
        %2839 = vmatpush1.bf16.msra.mxu0 %v2815
        %2840 = vmatprep.subr.bf16.mxu0 0
        %2841 = vmatpush1.bf16.msra.mxu0 %v2814
        %2842 = vmatprep.subr.bf16.mxu0 0
        %2843 = vmatpush1.bf16.msra.mxu0 %v2813
        %2844 = vmatprep.subr.bf16.mxu0 0
        %2845 = vmatpush2.bf16.msra.mxu0 0
        %2846 = vmatprep.subr.bf16.mxu0 0
        %2847 = vmatpush2.bf16.msra.mxu0 0
        %2848 = vmatprep.subr.bf16.mxu0 0
        %2849 = vmatpush2.bf16.msra.mxu0 0
        %2850 = vmatprep.subr.bf16.mxu0 0
        %2851 = vmatpush2.bf16.msra.mxu0 0
        %2852 = vmatprep.subr.bf16.mxu0 0
        %2853 = vmatpush2.bf16.msra.mxu0 0
        %2854 = vmatprep.subr.bf16.mxu0 0
        %2855 = vmatpush2.bf16.msra.mxu0 0
        %2856 = vmatprep.subr.bf16.mxu0 0
        %2857 = vmatpush2.bf16.msra.mxu0 0
        %2858 = vmatprep.subr.bf16.mxu0 0
        %2859 = vmatpush2.bf16.msra.mxu0 0
        %2860 = vmatprep.mubr.bf16.mxu0 0
        %2861 = vmatmul.mubr.bf16.gmra.mxu0 %v2826
        %v2862 = vpop.f32.mrf.mxu0
        %v2863 = vadd.f32 %v2787, %v2862
        %v2864 = vpop.f32.mrf.mxu0
        %v2865 = vpop.f32.mrf.mxu0
        %v2866 = vpop.f32.mrf.mxu0
        %2867 = vdwg.mxu0
        %v2868 = vmax.f32 %v2863, 0.0
        %vm2869 = vcmask 260096
        %2870 = vst.msk [vmem:[#allocation2] sm:$0x7f] %vm2869, %v2868
        %v2871 = vld [vmem:[#allocation2] ss:$3 sm:$0x3]
        %v2872 = vld [vmem:[%s2604] ss:$3 sm:$0x3]
        %v2873 = vld [vmem:[%s2606] ss:$3 sm:$0x3]
        %v2874 = vmax.f32 %v2871, %v2872
        %v2875 = vmax.f32 %v2874, %v2873
        %vm2876 = vcmask 254976
        %v2877 = vsel %vm2876, %v2875, 0.0
        %v2878 = vrot.slane %v2877, 4
        %v2879 = vadd.f32 %v2877, %v2878
        %v2880 = vrot.slane %v2879, 2
        %v2881 = vadd.f32 %v2879, %v2880
        %v2882 = vrot.slane %v2881, 1
        %v2883 = vadd.f32 %v2881, %v2882
        %v2884 = vrcp.pop 2.0
        %v2885 = vmul.f32 %v2883, %v2884
        %v2886 = vpack.c.bf16 %v2885, %v2885
        %v2887 = vld [vmem:[%s11] sm:$0xf]
        %v2888 = vld [vmem:[%s11 + $0x4] sm:$0xf]
        %v2889 = vld [vmem:[%s11 + $0x8] sm:$0xf]
        %v2890 = vld [vmem:[%s11 + $0xc] sm:$0xf]
        %v2891 = vld [vmem:[%s12] sm:$0x1]
        %v2896 = vunpack.c.l.b16 %v2887
        %v2897 = vunpack.c.l.b16 %v2888
        %v2898 = vunpack.c.l.b16 %v2889
        %v2899 = vunpack.c.l.b16 %v2890
        %v2900 = vpack.c.b16 %v2897, %v2896
        %v2901 = vpack.c.b16 %v2899, %v2898
        %v2905 = vsel %vm2493, %v2886, 0
        %2907 = vmatprep.subr.bf16.mxu0 0
        %2908 = vmatpush1.bf16.msra.mxu0 0
        %2909 = vmatprep.subr.bf16.mxu0 0
        %2910 = vmatpush1.bf16.msra.mxu0 0
        %2911 = vmatprep.subr.bf16.mxu0 0
        %2912 = vmatpush1.bf16.msra.mxu0 0
        %2913 = vmatprep.subr.bf16.mxu0 0
        %2914 = vmatpush1.bf16.msra.mxu0 0
        %2915 = vmatprep.subr.bf16.mxu0 0
        %2916 = vmatpush1.bf16.msra.mxu0 0
        %2917 = vmatprep.subr.bf16.mxu0 0
        %2918 = vmatpush1.bf16.msra.mxu0 0
        %2919 = vmatprep.subr.bf16.mxu0 0
        %2920 = vmatpush1.bf16.msra.mxu0 %v2901
        %2921 = vmatprep.subr.bf16.mxu0 0
        %2922 = vmatpush1.bf16.msra.mxu0 %v2900
        %2923 = vmatprep.subr.bf16.mxu0 0
        %2924 = vmatpush2.bf16.msra.mxu0 0
        %2925 = vmatprep.subr.bf16.mxu0 0
        %2926 = vmatpush2.bf16.msra.mxu0 0
        %2927 = vmatprep.subr.bf16.mxu0 0
        %2928 = vmatpush2.bf16.msra.mxu0 0
        %2929 = vmatprep.subr.bf16.mxu0 0
        %2930 = vmatpush2.bf16.msra.mxu0 0
        %2931 = vmatprep.subr.bf16.mxu0 0
        %2932 = vmatpush2.bf16.msra.mxu0 0
        %2933 = vmatprep.subr.bf16.mxu0 0
        %2934 = vmatpush2.bf16.msra.mxu0 0
        %2935 = vmatprep.subr.bf16.mxu0 0
        %2936 = vmatpush2.bf16.msra.mxu0 0
        %2937 = vmatprep.subr.bf16.mxu0 0
        %2938 = vmatpush2.bf16.msra.mxu0 0
        %2939 = vmatprep.mubr.bf16.mxu0 0
        %2940 = vmatmul.mubr.bf16.gmra.mxu0 %v2905
        %v2941 = vpop.f32.mrf.mxu0
        %v2942 = vadd.f32 %v2891, %v2941
        %v2943 = vpop.f32.mrf.mxu0
        %v2944 = vpop.f32.mrf.mxu0
        %v2945 = vpop.f32.mrf.mxu0
        %2946 = vdwg.mxu0
        %v2947 = vsub.f32 0.0, %v2942
        %v2948 = vmul.f32 %v2947, 1.442695
        %v2949 = vpow.pop %v2948
        %v2950 = vadd.f32 %v2949, 1.0
        %v2951 = vrcp.pop %v2950
        %v2952 = vmul.f32 1.0, %v2951
        %2953 = vst [vmem:[%s436] sm:$0x1] %v2952
        %s2954 = sand.u32 %s317, 1
        %s2955 = scalar_lea.sflag [#allocation6], %s2954
        %s2956 = sand.u32 %s317, 1
        %s2957 = scalar_lea.vmem [#allocation5], %s2956
        // Predicated region
        $region73: #{baseline_forward.1} parent=71 // pred_check
          %p2958 = pneg %p327
        $region74: #{baseline_forward.1} parent=71 // pred_check_branch
          %2960 = sbr.rel (%p2958) target = $region76
        $region75: #{baseline_forward.1} parent=71 // pred_region
          %s2962 = ssub.s32 16, 16
          %2963 = vsyncadd %s2955, %s2962
          %s2964 = smul.addr %s31, 16
          %s2965 = scalar_lea.hbm %s13, %s2964
          %s2967 = sshll.u32 %s2957, 4
          %s2968 = int_to_ptr.vmem [resolvable:$true] %s2967
          %2970 = dma.vmem_to_hbm [thread:$0]  %s2968, 16, %s2965, %s2955
        $region76: #{baseline_forward.1} parent=71 // pred_fallthru
          _
      $region72: #{baseline_forward.1} parent=5 // pred_fallthru
        _
      %p2971 = scmp.le.s32.totalorder 2, %s26
      // Predicated region
      $region77: #{baseline_forward.1} parent=5 // pred_check
        %p2972 = pneg %p2971
      $region78: #{baseline_forward.1} parent=5 // pred_check_branch
        %2974 = sbr.rel (%p2972) target = $region80
      $region79: #{baseline_forward.1} parent=5 // pred_region
        %s2975 = ssub.s32 %s26, 2
        // Predicated region
        $region81: #{baseline_forward.1} parent=79 // pred_check
          %p2976 = pneg %p333
        $region82: #{baseline_forward.1} parent=79 // pred_check_branch
          %2978 = sbr.rel (%p2976) target = $region84
        $region83: #{baseline_forward.1} parent=79 // pred_region
          %s2979 = sand.u32 %s318, 1
          %s2980 = scalar_lea.sflag [#allocation6], %s2979
          %s2981 = sand.u32 %s318, 1
          %s2982 = scalar_lea.vmem [#allocation5], %s2981
          %2983 = dma.done %s2980, 16
        $region84: #{baseline_forward.1} parent=79 // pred_fallthru
          _
      $region80: #{baseline_forward.1} parent=5 // pred_fallthru
        _
    $region6: #{baseline_forward.1} parent=1 // loop_footer
      %s30 = sadd.s32 1, %s26
    $region7: #{baseline_forward.1} parent=1 // loop_footer_branch
      %25 = sbr.rel target = $region3
    $region8: #{baseline_forward.1} parent=1 // loop_exit
      _
    %2984 = vsyncpa [#allocation6], 1
    %s2985 = scalar_lea.sflag [#allocation6], 1
    %2986 = vsyncpa %s2985, 1

</llo_original>
